<compile_context>
chip_gen: v5e
topology: v5e:2x2
jax: 0.10.0
libtpu: 0.0.40
codegen_flags: <defaults>
</compile_context>

<pallas_src>
import functools

import jax
import jax.numpy as jnp
from jax.experimental import pallas as pl
from jax.experimental.pallas import tpu as pltpu


# ----------------------------------------------------------------------------
# tile selection
# ----------------------------------------------------------------------------
def _pick_tiles(n, hw, c, ci, vmem_block_budget=24 << 20):
    """Pick (bn, th): images-per-tile and rows(spatial)-per-tile.

    Per-row VMEM estimate counts the double-buffered x/out blocks plus the
    in-kernel temporaries (bf16 copy of x, h, xl/wei), so it does not
    undercount the real footprint.
    """
    bytes_per_row = (8 * c + 2 * max(ci, 1)) * 4
    max_rows = max(8, min(4096, vmem_block_budget // bytes_per_row))

    if hw > max_rows:
        # large images: tile the spatial axis (sublane-aligned rows)
        th = max(8, (max_rows // 8) * 8)
        bn = 1
    else:
        # small images: whole image per tile; collapse batches into the tile
        th = hw
        bn = 1
        if hw % 8 == 0:  # leading-dim collapse is a free reshape only then
            bn = max(1, min(n, max_rows // hw))
            if n >= 2:
                # keep >= 2 grid steps so megacore (v7x, 2 TCs) has work to split
                bn = min(bn, (n + 1) // 2)
    return bn, th


# ----------------------------------------------------------------------------
# kernel: local 1x1 conv/BN/ReLU -> 1x1 conv/BN, + precomputed global gate
# offset, sigmoid gate, channel reweight.  One (bn, th, C) tile per step.
# ----------------------------------------------------------------------------
def _ms_cam_kernel(x_ref, w1_ref, b1_ref, w2_ref, goff_ref, o_ref, *,
                   compute_dtype):
    x = x_ref[...]                                  # (bn, th, C), original dtype
    bn, th, c = x.shape
    x2 = x.reshape(bn * th, c)

    # in-kernel cast (no extra HBM pass); f32 path: no-op
    xm = x2.astype(compute_dtype)

    # local 1x1 conv + BN (folded into w1/b1) + ReLU
    h = jnp.dot(xm, w1_ref[...], preferred_element_type=jnp.float32) + b1_ref[...]
    h = jnp.maximum(h, 0.0)

    # second 1x1 conv + BN (its bias b2 is folded into goff with the global branch)
    xl = jnp.dot(h.astype(w2_ref.dtype), w2_ref[...],
                 preferred_element_type=jnp.float32)

    # sigmoid gate (EUP) in f32; goff is (bn, 1, C) and broadcasts over rows
    wei = jax.nn.sigmoid(xl.reshape(bn, th, c) + goff_ref[...])

    # multiply against the ORIGINAL (f32) x for full output accuracy
    o_ref[...] = (x.astype(jnp.float32) * wei).astype(o_ref.dtype)


def ms_cam_pallas(x_flat, gate_off, params, compute_dtype=jnp.float32):
    """x_flat: (N, HW, C) float32 (read once, never copied in the wrapper).
    gate_off: (N, C) = global-branch output xg + local bias b2 (f32)."""
    N, HW, C = x_flat.shape
    Ci = params["w1"].shape[1]

    # only the tiny weights get cast/reshaped in the wrapper (O(C*Ci), free)
    w1 = params["w1"].astype(compute_dtype)           # (C, Ci)
    b1 = params["b1"]                                  # (1, Ci) f32
    w2 = params["w2"].astype(compute_dtype)           # (Ci, C)
    goff = gate_off.reshape(N, 1, C)                   # (N, 1, C) f32

    bn, th = _pick_tiles(N, HW, C, Ci)
    grid = (pl.cdiv(N, bn), pl.cdiv(HW, th))

    kernel = functools.partial(_ms_cam_kernel, compute_dtype=compute_dtype)

    out = pl.pallas_call(
        kernel,
        out_shape=jax.ShapeDtypeStruct((N, HW, C), x_flat.dtype),
        grid_spec=pltpu.PrefetchScalarGridSpec(
            num_scalar_prefetch=0,
            grid=grid,
            in_specs=[
                pl.BlockSpec((bn, th, C), lambda n, t: (n, t, 0)),   # x tile
                pl.BlockSpec((C, Ci), lambda n, t: (0, 0)),          # w1 (BN folded)
                pl.BlockSpec((1, Ci), lambda n, t: (0, 0)),          # b1 (BN folded)
                pl.BlockSpec((Ci, C), lambda n, t: (0, 0)),          # w2 (BN folded)
                pl.BlockSpec((bn, 1, C), lambda n, t: (n, 0, 0)),    # xg + b2
            ],
            out_specs=pl.BlockSpec((bn, th, C), lambda n, t: (n, t, 0)),
        ),
        compiler_params=pltpu.CompilerParams(
            dimension_semantics=("parallel", "parallel"),
            vmem_limit_bytes=48 * 1024 * 1024,   # v5e default (16 MiB) is too small
        ),
    )(x_flat, w1, b1, w2, goff)

    return out


def ms_cam_forward_nhwc(x_nhwc, params, compute_dtype=jnp.float32):
    """NHWC entry point (no layout transposes -> preferred for production)."""
    N, H, W, C = x_nhwc.shape
    x_flat = x_nhwc.reshape(N, H * W, C)             # free metadata reshape

    # global branch hoisted out of the kernel (O(N*C) after the mean);
    # fold the local branch's second bias b2 into the gate offset.
    xm = jnp.mean(x_flat, axis=1)                                     # (N, C)
    hg = jnp.maximum(xm @ params["wg1"] + params["bg1"][0], 0.0)
    xg = hg @ params["wg2"] + params["bg2"][0]                        # (N, C)
    gate_off = xg + params["b2"][0]

    out_flat = ms_cam_pallas(x_flat, gate_off, params, compute_dtype)
    return out_flat.reshape(N, H, W, C)


def ms_cam_forward(x_nchw, params, compute_dtype=jnp.float32):
    """NCHW compatibility wrapper matching the PyTorch module's layout.

    NOTE: each transpose is a full HBM read+write; keep the surrounding model
    NHWC and call ms_cam_forward_nhwc directly for best end-to-end perf.
    """
    out_nhwc = ms_cam_forward_nhwc(jnp.transpose(x_nchw, (0, 2, 3, 1)),
                                   params, compute_dtype)
    return jnp.transpose(out_nhwc, (0, 3, 1, 2))


# ----------------------------------------------------------------------------
# parameter construction (deterministic) + BN folding (plain-JAX glue)
# ----------------------------------------------------------------------------
def _fold_conv_bn(w, b, gamma, beta, mean, var, eps=1e-5):
    """1x1 conv (in->out) followed by eval-mode BatchNorm, folded.
    w: (Cin, Cout), b: (Cout,). Returns (w', b') s.t. y = x @ w' + b'."""
    scale = gamma / jnp.sqrt(var + eps)
    w_f = w * scale[None, :]
    b_f = (b - mean) * scale + beta
    return w_f.astype(jnp.float32), b_f.reshape(1, -1).astype(jnp.float32)


def make_ms_cam_params(key, channels, r=4):
    ci = max(1, channels // r)
    ks = jax.random.split(key, 12)

    def conv(k, cin, cout):
        return 0.1 * jax.random.normal(k, (cin, cout), jnp.float32)

    def bias(k, cout):
        return 0.05 * jax.random.normal(k, (cout,), jnp.float32)

    def bn(k, cout):
        kg, kb, km, kv = jax.random.split(k, 4)
        gamma = 1.0 + 0.1 * jax.random.normal(kg, (cout,), jnp.float32)
        beta = 0.1 * jax.random.normal(kb, (cout,), jnp.float32)
        mean = 0.05 * jax.random.normal(km, (cout,), jnp.float32)
        var = 0.5 + jnp.abs(0.5 * jax.random.normal(kv, (cout,), jnp.float32))
        return gamma, beta, mean, var

    # local branch
    w1, b1 = conv(ks[0], channels, ci), bias(ks[1], ci)
    w2, b2 = conv(ks[2], ci, channels), bias(ks[3], channels)
    # global branch
    wg1, bg1 = conv(ks[4], channels, ci), bias(ks[5], ci)
    wg2, bg2 = conv(ks[6], ci, channels), bias(ks[7], channels)

    w1f, b1f = _fold_conv_bn(w1, b1, *bn(ks[8], ci))
    w2f, b2f = _fold_conv_bn(w2, b2, *bn(ks[9], channels))
    wg1f, bg1f = _fold_conv_bn(wg1, bg1, *bn(ks[10], ci))
    wg2f, bg2f = _fold_conv_bn(wg2, bg2, *bn(ks[11], channels))

    return {"w1": w1f, "b1": b1f, "w2": w2f, "b2": b2f,
            "wg1": wg1f, "bg1": bg1f, "wg2": wg2f, "bg2": bg2f}


# ----------------------------------------------------------------------------
# pure-JAX references (same folded params) for verification
# ----------------------------------------------------------------------------
def ms_cam_reference(x_nchw, p):
    N, C, H, W = x_nchw.shape
    x = jnp.transpose(x_nchw, (0, 2, 3, 1)).reshape(N, H * W, C)
    h = jnp.maximum(x @ p["w1"] + p["b1"], 0.0)
    xl = h @ p["w2"] + p["b2"]
    xm = jnp.mean(x, axis=1, keepdims=True)
    hg = jnp.maximum(xm @ p["wg1"] + p["bg1"], 0.0)
    xg = hg @ p["wg2"] + p["bg2"]
    wei = jax.nn.sigmoid(xl + xg)
    out = x * wei
    return jnp.transpose(out.reshape(N, H, W, C), (0, 3, 1, 2))


def ms_cam_reference_bf16(x_nchw, p):
    """Mimics the bf16-MXU kernel path: bf16 matmul inputs, f32 accumulation,
    f32 gate, and the final multiply against the original f32 x."""
    N, C, H, W = x_nchw.shape
    x = jnp.transpose(x_nchw, (0, 2, 3, 1)).reshape(N, H * W, C)
    q = lambda a: a.astype(jnp.bfloat16)
    h = jnp.maximum(
        jnp.dot(q(x), q(p["w1"]), preferred_element_type=jnp.float32) + p["b1"], 0.0)
    xl = jnp.dot(q(h), q(p["w2"]), preferred_element_type=jnp.float32)
    xm = jnp.mean(x, axis=1, keepdims=True)
    hg = jnp.maximum(xm @ p["wg1"] + p["bg1"], 0.0)
    xg = hg @ p["wg2"] + p["bg2"]
    wei = jax.nn.sigmoid(xl + xg + p["b2"])
    out = x * wei
    return jnp.transpose(out.reshape(N, H, W, C), (0, 3, 1, 2))


if __name__ == "__main__":
    key = jax.random.PRNGKey(0)
    k1, k2, k3, k4, k5 = jax.random.split(key, 5)

    # --- main case: module defaults (channels=64, r=4), 16x16 spatial -------
    N, C, H, W = 2, 64, 16, 16
    x = jax.random.normal(k1, (N, C, H, W), jnp.float32)
    params = make_ms_cam_params(k2, C, r=4)

    out = jax.block_until_ready(ms_cam_forward(x, params))
    ref = ms_cam_reference(x, params)
    assert out.shape == (N, C, H, W)
    assert jnp.allclose(out, ref, atol=1e-4, rtol=1e-4), "f32 mismatch vs reference"

    # --- bf16 MXU path: x stays f32 in HBM, cast happens inside the kernel --
    out_bf = jax.block_until_ready(
        ms_cam_forward(x, params, compute_dtype=jnp.bfloat16))
    ref_bf = ms_cam_reference_bf16(x, params)
    assert jnp.allclose(out_bf, ref_bf, atol=2e-2, rtol=2e-2), \
        "bf16 mismatch vs reference"

    # --- ragged case: C not a multiple of 128, HW not a multiple of 8 -------
    N2, C2, H2, W2 = 3, 48, 7, 7
    x2 = jax.random.normal(k3, (N2, C2, H2, W2), jnp.float32)
    params2 = make_ms_cam_params(k4, C2, r=4)
    out2 = jax.block_until_ready(ms_cam_forward(x2, params2))
    ref2 = ms_cam_reference(x2, params2)
    assert jnp.allclose(out2, ref2, atol=1e-4, rtol=1e-4), "ragged mismatch"

    # --- small-HW case exercising the batch-collapse (bn > 1) tiling --------
    N3, C3, H3, W3 = 4, 64, 8, 8
    x3 = jax.random.normal(k5, (N3, C3, H3, W3), jnp.float32)
    out3 = jax.block_until_ready(ms_cam_forward(x3, params))
    ref3 = ms_cam_reference(x3, params)
    assert jnp.allclose(out3, ref3, atol=1e-4, rtol=1e-4), "batch-collapse mismatch"

    print("KERNEL_OK")
</pallas_src>

<mosaic_0001>
module attributes {stable_mosaic.version = 11 : i64} {
  func.func @_ms_cam_kernel(%arg0: i32, %arg1: i32, %arg2: memref<1x256x64xf32, #tpu.memory_space<vmem>>, %arg3: memref<64x16xf32, #tpu.memory_space<vmem>>, %arg4: memref<1x16xf32, #tpu.memory_space<vmem>>, %arg5: memref<16x64xf32, #tpu.memory_space<vmem>>, %arg6: memref<1x1x64xf32, #tpu.memory_space<vmem>>, %arg7: memref<1x256x64xf32, #tpu.memory_space<vmem>>) attributes {dimension_semantics = [#tpu.dimension_semantics<parallel>, #tpu.dimension_semantics<parallel>], iteration_bounds = array<i64: 2, 1>, scalar_prefetch = 0 : i64, scratch_operands = 0 : i64, tpu.core_type = #tpu.core_type<tc>, window_params = [{transform_indices = @transform_0, window_bounds = array<i64: 1, 256, 64>}, {pipeline_mode = #tpu.pipeline_mode<synchronous>, transform_indices = @transform_1, window_bounds = array<i64: 64, 16>}, {pipeline_mode = #tpu.pipeline_mode<synchronous>, transform_indices = @transform_2, window_bounds = array<i64: 1, 16>}, {pipeline_mode = #tpu.pipeline_mode<synchronous>, transform_indices = @transform_3, window_bounds = array<i64: 16, 64>}, {transform_indices = @transform_4, window_bounds = array<i64: 1, 1, 64>}, {transform_indices = @transform_5, window_bounds = array<i64: 1, 256, 64>}]} {
    %c0 = arith.constant 0 : index
    %c0_0 = arith.constant 0 : index
    %c0_1 = arith.constant 0 : index
    %0 = vector.load %arg2[%c0, %c0_0, %c0_1] : memref<1x256x64xf32, #tpu.memory_space<vmem>>, vector<1x256x64xf32>
    %1 = vector.shape_cast %0 : vector<1x256x64xf32> to vector<256x64xf32>
    %c0_2 = arith.constant 0 : index
    %c0_3 = arith.constant 0 : index
    %2 = vector.load %arg3[%c0_2, %c0_3] : memref<64x16xf32, #tpu.memory_space<vmem>>, vector<64x16xf32>
    %cst = arith.constant dense<0.000000e+00> : vector<256x16xf32>
    %3 = tpu.matmul %1, %2, %cst {dimension_numbers = #tpu.dot_dimension_numbers<[1], [0], [0], [1], [0, 0, 1, 1], [], []>} : vector<256x64xf32>, vector<64x16xf32>, vector<256x16xf32> -> vector<256x16xf32>
    %c0_4 = arith.constant 0 : index
    %c0_5 = arith.constant 0 : index
    %4 = vector.load %arg4[%c0_4, %c0_5] : memref<1x16xf32, #tpu.memory_space<vmem>>, vector<1x16xf32>
    %5 = vector.broadcast %4 : vector<1x16xf32> to vector<256x16xf32>
    %6 = arith.addf %3, %5 : vector<256x16xf32>
    %cst_6 = arith.constant 0.000000e+00 : f32
    %7 = vector.broadcast %cst_6 : f32 to vector<256x16xf32>
    %8 = arith.maximumf %6, %7 : vector<256x16xf32>
    %c0_7 = arith.constant 0 : index
    %c0_8 = arith.constant 0 : index
    %9 = vector.load %arg5[%c0_7, %c0_8] : memref<16x64xf32, #tpu.memory_space<vmem>>, vector<16x64xf32>
    %cst_9 = arith.constant dense<0.000000e+00> : vector<256x64xf32>
    %10 = tpu.matmul %8, %9, %cst_9 {dimension_numbers = #tpu.dot_dimension_numbers<[1], [0], [0], [1], [0, 0, 1, 1], [], []>} : vector<256x16xf32>, vector<16x64xf32>, vector<256x64xf32> -> vector<256x64xf32>
    %11 = vector.shape_cast %10 : vector<256x64xf32> to vector<1x256x64xf32>
    %c0_10 = arith.constant 0 : index
    %c0_11 = arith.constant 0 : index
    %c0_12 = arith.constant 0 : index
    %12 = vector.load %arg6[%c0_10, %c0_11, %c0_12] : memref<1x1x64xf32, #tpu.memory_space<vmem>>, vector<1x1x64xf32>
    %13 = vector.broadcast %12 : vector<1x1x64xf32> to vector<1x256x64xf32>
    %14 = arith.addf %11, %13 : vector<1x256x64xf32>
    %15 = arith.negf %14 : vector<1x256x64xf32>
    %16 = math.exp %15 : vector<1x256x64xf32>
    %cst_13 = arith.constant 1.000000e+00 : f32
    %17 = vector.broadcast %cst_13 : f32 to vector<1x256x64xf32>
    %18 = arith.addf %17, %16 : vector<1x256x64xf32>
    %19 = arith.divf %17, %18 : vector<1x256x64xf32>
    %20 = arith.mulf %0, %19 : vector<1x256x64xf32>
    %c0_14 = arith.constant 0 : index
    %c0_15 = arith.constant 0 : index
    %c0_16 = arith.constant 0 : index
    %21 = vector.load %arg7[%c0_14, %c0_15, %c0_16] : memref<1x256x64xf32, #tpu.memory_space<vmem>>, vector<1x256x64xf32>
    tpu.vector_store %arg7[%c0_14, %c0_15, %c0_16], %20 {strides = array<i32>} : memref<1x256x64xf32, #tpu.memory_space<vmem>>, vector<1x256x64xf32>,
    return
  }
  func.func @transform_0(%arg0: i32, %arg1: i32) -> (i32, i32, i32) {
    %c0_i32 = arith.constant 0 : i32
    %c0_i32_0 = arith.constant 0 : i32
    return %arg0, %arg1, %c0_i32 : i32, i32, i32
  }
  func.func @transform_1(%arg0: i32, %arg1: i32) -> (i32, i32) {
    %c0_i32 = arith.constant 0 : i32
    %c0_i32_0 = arith.constant 0 : i32
    %c0_i32_1 = arith.constant 0 : i32
    return %c0_i32, %c0_i32_0 : i32, i32
  }
  func.func @transform_2(%arg0: i32, %arg1: i32) -> (i32, i32) {
    %c0_i32 = arith.constant 0 : i32
    %c0_i32_0 = arith.constant 0 : i32
    %c0_i32_1 = arith.constant 0 : i32
    return %c0_i32, %c0_i32_0 : i32, i32
  }
  func.func @transform_3(%arg0: i32, %arg1: i32) -> (i32, i32) {
    %c0_i32 = arith.constant 0 : i32
    %c0_i32_0 = arith.constant 0 : i32
    %c0_i32_1 = arith.constant 0 : i32
    return %c0_i32, %c0_i32_0 : i32, i32
  }
  func.func @transform_4(%arg0: i32, %arg1: i32) -> (i32, i32, i32) {
    %c0_i32 = arith.constant 0 : i32
    %c0_i32_0 = arith.constant 0 : i32
    %c0_i32_1 = arith.constant 0 : i32
    return %arg0, %c0_i32, %c0_i32_0 : i32, i32, i32
  }
  func.func @transform_5(%arg0: i32, %arg1: i32) -> (i32, i32, i32) {
    %c0_i32 = arith.constant 0 : i32
    %c0_i32_0 = arith.constant 0 : i32
    return %arg0, %arg1, %c0_i32 : i32, i32, i32
  }
}

</mosaic_0001>

<llo_original>
// kernel: tpu_custom_call.1
$region0: #{tpu_custom_call.1}
  #allocation0 [shape = 'u32[]', space=smem, size = 0x4, offset = 0x4, fixed_abs, tag = 'smem constant byte address 0x4 - core index']
  #allocation1 [shape = 'u32[72,128]{1,0:T(1,128)}', space=vmem, size = 0x9000, scoped, tag = 'internal scratch']
  %s0 = inlined_call_operand.vmem [shape: f32[2,256,64], index: 0, kind: input, shape index: {}]
  %s1 = inlined_call_operand.vmem [shape: f32[64,16], index: 1, kind: input, shape index: {}]
  %s2 = inlined_call_operand.vmem [shape: f32[1,16], index: 2, kind: input, shape index: {}]
  %s3 = inlined_call_operand.vmem [shape: f32[16,64], index: 3, kind: input, shape index: {}]
  %s4 = inlined_call_operand.vmem [shape: f32[2,1,64], index: 4, kind: input, shape index: {}]
  %s5 = inlined_call_operand.vmem [shape: f32[2,256,64], index: 5, kind: output, shape index: {}]
  %s6 = sld [smem:[#allocation0]]
  $region53: #{tpu_custom_call.1} parent=0
    _
  %s8 = ssub.s32 1, %s6
  %s9 = scalar_select 0, %s8, %s6
  loop: start=0, step=1, limit=4
  $region2: #{tpu_custom_call.1} parent=0 // loop_pre_header
    _
  $region3: #{tpu_custom_call.1} parent=0 // loop_header
    %s11 = sphi 0, %s15
    %p12 = scmp.ge.s32.totalorder %s11, 4
    %s18 = sphi 0, %s30
    %s19 = sphi 0, %s26
    %s20 = sphi 0, %s18
    %s21 = sphi 0, %s19
    %s22 = sphi 0, %s20
    %s23 = sphi 0, %s21
    %s35 = sphi 0, %s37
    %s38 = sphi 0, %s35
    %s39 = sphi 0, %s38
    %s55 = sphi 0, %s39
    %s59 = sphi 0, %s59
    %s61 = sphi 0, %s59
    %s62 = sphi 0, %s61
    %s76 = sphi 0, %s62
    %s80 = sphi 0, %s80
    %s82 = sphi 0, %s80
    %s83 = sphi 0, %s82
    %s97 = sphi 0, %s83
    %s101 = sphi 0, %s101
    %s103 = sphi 0, %s101
    %s104 = sphi 0, %s103
    %s118 = sphi 0, %s104
    %s124 = sphi 0, %s126
    %s127 = sphi 0, %s124
    %s128 = sphi 0, %s127
    %s144 = sphi 0, %s128
    %s152 = sphi 0, %s154
    %s155 = sphi 0, %s152
    %s156 = sphi 0, %s155
    %s172 = sphi 0, %s156
  $region4: #{tpu_custom_call.1} parent=0 // loop_header_branch
    %14 = sbr.rel (%p12) target = $region8
  $region5: #{tpu_custom_call.1} parent=0 // loop_body
    %s16 = ssub.s32 %s11, 1
    %s17 = ssub.s32 %s11, 2
    %s24 = sadd.s32 1, %s19
    %p25 = scmp.ge.s32.totalorder %s24, 1
    %s26 = scalar_select %p25, 0, %s24
    %s27 = sadd.s32 1, %s18
    %s28 = scalar_select %p25, %s27, %s18
    %p29 = scmp.ge.s32.totalorder %s28, 2
    %s30 = scalar_select %p29, 0, %s28
    %s31 = ssub.s32 %s18, %s30
    %s32 = ssub.s32 %s19, %s26
    %s33 = sor.u32 %s31, %s32
    %p34 = scmp.eq.s32.totalorder %s33, 0
    %s36 = sadd.s32 %s35, 1
    %s37 = scalar_select %p34, %s35, %s36
    %p40 = pneg %p34
    %p41 = scmp.eq.s32.totalorder %s11, 1
    %p42 = por %p40, %p41
    %p43 = scmp.ne.s32.totalorder %s35, %s38
    %p44 = scmp.eq.s32.totalorder %s11, 0
    %p45 = por %p43, %p44
    %p46 = scmp.ne.s32.totalorder %s35, %s38
    %p47 = scmp.eq.s32.totalorder %s16, 1
    %p48 = por %p46, %p47
    %p49 = scmp.ne.s32.totalorder %s38, %s39
    %p50 = scmp.eq.s32.totalorder %s16, 0
    %p51 = por %p49, %p50
    %p52 = scmp.ne.s32.totalorder %s38, %s39
    %p53 = scmp.eq.s32.totalorder %s17, 1
    %p54 = por %p52, %p53
    %p56 = scmp.ne.s32.totalorder %s39, %s55
    %p57 = scmp.eq.s32.totalorder %s17, 0
    %p58 = por %p56, %p57
    %s60 = sadd.s32 %s59, 1
    %p63 = scmp.eq.s32.totalorder %s11, 1
    %p64 = scmp.ne.s32.totalorder %s59, %s61
    %p65 = scmp.eq.s32.totalorder %s11, 0
    %p66 = por %p64, %p65
    %p67 = scmp.ne.s32.totalorder %s59, %s61
    %p68 = scmp.eq.s32.totalorder %s16, 1
    %p69 = por %p67, %p68
    %p70 = scmp.ne.s32.totalorder %s61, %s62
    %p71 = scmp.eq.s32.totalorder %s16, 0
    %p72 = por %p70, %p71
    %p73 = scmp.ne.s32.totalorder %s61, %s62
    %p74 = scmp.eq.s32.totalorder %s17, 1
    %p75 = por %p73, %p74
    %p77 = scmp.ne.s32.totalorder %s62, %s76
    %p78 = scmp.eq.s32.totalorder %s17, 0
    %p79 = por %p77, %p78
    %s81 = sadd.s32 %s80, 1
    %p84 = scmp.eq.s32.totalorder %s11, 1
    %p85 = scmp.ne.s32.totalorder %s80, %s82
    %p86 = scmp.eq.s32.totalorder %s11, 0
    %p87 = por %p85, %p86
    %p88 = scmp.ne.s32.totalorder %s80, %s82
    %p89 = scmp.eq.s32.totalorder %s16, 1
    %p90 = por %p88, %p89
    %p91 = scmp.ne.s32.totalorder %s82, %s83
    %p92 = scmp.eq.s32.totalorder %s16, 0
    %p93 = por %p91, %p92
    %p94 = scmp.ne.s32.totalorder %s82, %s83
    %p95 = scmp.eq.s32.totalorder %s17, 1
    %p96 = por %p94, %p95
    %p98 = scmp.ne.s32.totalorder %s83, %s97
    %p99 = scmp.eq.s32.totalorder %s17, 0
    %p100 = por %p98, %p99
    %s102 = sadd.s32 %s101, 1
    %p105 = scmp.eq.s32.totalorder %s11, 1
    %p106 = scmp.ne.s32.totalorder %s101, %s103
    %p107 = scmp.eq.s32.totalorder %s11, 0
    %p108 = por %p106, %p107
    %p109 = scmp.ne.s32.totalorder %s101, %s103
    %p110 = scmp.eq.s32.totalorder %s16, 1
    %p111 = por %p109, %p110
    %p112 = scmp.ne.s32.totalorder %s103, %s104
    %p113 = scmp.eq.s32.totalorder %s16, 0
    %p114 = por %p112, %p113
    %p115 = scmp.ne.s32.totalorder %s103, %s104
    %p116 = scmp.eq.s32.totalorder %s17, 1
    %p117 = por %p115, %p116
    %p119 = scmp.ne.s32.totalorder %s104, %s118
    %p120 = scmp.eq.s32.totalorder %s17, 0
    %p121 = por %p119, %p120
    %s122 = ssub.s32 %s18, %s30
    %p123 = scmp.eq.s32.totalorder %s122, 0
    %s125 = sadd.s32 %s124, 1
    %s126 = scalar_select %p123, %s124, %s125
    %p129 = pneg %p123
    %p130 = scmp.eq.s32.totalorder %s11, 1
    %p131 = por %p129, %p130
    %p132 = scmp.ne.s32.totalorder %s124, %s127
    %p133 = scmp.eq.s32.totalorder %s11, 0
    %p134 = por %p132, %p133
    %p135 = scmp.ne.s32.totalorder %s124, %s127
    %p136 = scmp.eq.s32.totalorder %s16, 1
    %p137 = por %p135, %p136
    %p138 = scmp.ne.s32.totalorder %s127, %s128
    %p139 = scmp.eq.s32.totalorder %s16, 0
    %p140 = por %p138, %p139
    %p141 = scmp.ne.s32.totalorder %s127, %s128
    %p142 = scmp.eq.s32.totalorder %s17, 1
    %p143 = por %p141, %p142
    %p145 = scmp.ne.s32.totalorder %s128, %s144
    %p146 = scmp.eq.s32.totalorder %s17, 0
    %p147 = por %p145, %p146
    %s148 = ssub.s32 %s18, %s30
    %s149 = ssub.s32 %s19, %s26
    %s150 = sor.u32 %s148, %s149
    %p151 = scmp.eq.s32.totalorder %s150, 0
    %s153 = sadd.s32 %s152, 1
    %s154 = scalar_select %p151, %s152, %s153
    %p157 = pneg %p151
    %p158 = scmp.eq.s32.totalorder %s11, 1
    %p159 = por %p157, %p158
    %p160 = scmp.ne.s32.totalorder %s152, %s155
    %p161 = scmp.eq.s32.totalorder %s11, 0
    %p162 = por %p160, %p161
    %p163 = scmp.ne.s32.totalorder %s152, %s155
    %p164 = scmp.eq.s32.totalorder %s16, 1
    %p165 = por %p163, %p164
    %p166 = scmp.ne.s32.totalorder %s155, %s156
    %p167 = scmp.eq.s32.totalorder %s16, 0
    %p168 = por %p166, %p167
    %p169 = scmp.ne.s32.totalorder %s155, %s156
    %p170 = scmp.eq.s32.totalorder %s17, 1
    %p171 = por %p169, %p170
    %p173 = scmp.ne.s32.totalorder %s156, %s172
    %p174 = scmp.eq.s32.totalorder %s17, 0
    %p175 = por %p173, %p174
    %p176 = scmp.le.s32.totalorder 1, %s11
    %p177 = scmp.lt.s32.totalorder %s11, 3
    %p178 = pnand %p176, %p177
    %p179 = pneg %p178
    // Predicated region
    $region9: #{tpu_custom_call.1} parent=5 // pred_check
      _
    $region10: #{tpu_custom_call.1} parent=5 // pred_check_branch
      %181 = sbr.rel (%p178) target = $region12
    $region11: #{tpu_custom_call.1} parent=5 // pred_region
      %s182 = ssub.s32 %s11, 1
      // Predicated region
      $region13: #{tpu_custom_call.1} parent=11 // pred_check
        %p183 = pneg %p72
      $region14: #{tpu_custom_call.1} parent=11 // pred_check_branch
        %185 = sbr.rel (%p183) target = $region16
      $region15: #{tpu_custom_call.1} parent=11 // pred_region
        _
      $region16: #{tpu_custom_call.1} parent=11 // pred_fallthru
        _
      // Predicated region
      $region17: #{tpu_custom_call.1} parent=11 // pred_check
        %p186 = pneg %p93
      $region18: #{tpu_custom_call.1} parent=11 // pred_check_branch
        %188 = sbr.rel (%p186) target = $region20
      $region19: #{tpu_custom_call.1} parent=11 // pred_region
        _
      $region20: #{tpu_custom_call.1} parent=11 // pred_fallthru
        _
      // Predicated region
      $region21: #{tpu_custom_call.1} parent=11 // pred_check
        %p189 = pneg %p114
      $region22: #{tpu_custom_call.1} parent=11 // pred_check_branch
        %191 = sbr.rel (%p189) target = $region24
      $region23: #{tpu_custom_call.1} parent=11 // pred_region
        _
      $region24: #{tpu_custom_call.1} parent=11 // pred_fallthru
        _
    $region12: #{tpu_custom_call.1} parent=5 // pred_fallthru
      _
    %p192 = scmp.lt.s32.totalorder %s11, 2
    // Predicated region
    $region25: #{tpu_custom_call.1} parent=5 // pred_check
      %p193 = pneg %p192
    $region26: #{tpu_custom_call.1} parent=5 // pred_check_branch
      %195 = sbr.rel (%p193) target = $region28
    $region27: #{tpu_custom_call.1} parent=5 // pred_region
      // Predicated region
      $region29: #{tpu_custom_call.1} parent=27 // pred_check
        %p196 = pneg %p45
      $region30: #{tpu_custom_call.1} parent=27 // pred_check_branch
        %198 = sbr.rel (%p196) target = $region32
      $region31: #{tpu_custom_call.1} parent=27 // pred_region
        %s199 = smul.u32 32, %s19
        %p200 = scmp.lt.s32.totalorder %s18, 1
        %s201 = scalar_select %p200, %s18, 1
        %p202 = scmp.lt.s32.totalorder %s199, 31
        %s203 = scalar_select %p202, %s199, 31
        %s204 = smul.addr %s201, 32
        %s205 = sadd.s32 %s203, %s204
        %s206 = smul.addr %s205, 8
        %s207 = scalar_lea.vmem %s0, %s206
        %s208 = smul.u32 32, %s19
      $region32: #{tpu_custom_call.1} parent=27 // pred_fallthru
        _
      // Predicated region
      $region33: #{tpu_custom_call.1} parent=27 // pred_check
        %p209 = pneg %p134
      $region34: #{tpu_custom_call.1} parent=27 // pred_check_branch
        %211 = sbr.rel (%p209) target = $region36
      $region35: #{tpu_custom_call.1} parent=27 // pred_region
        %p212 = scmp.lt.s32.totalorder %s18, 1
        %s213 = scalar_select %p212, %s18, 1
        %s214 = scalar_lea.vmem %s4, %s213
      $region36: #{tpu_custom_call.1} parent=27 // pred_fallthru
        _
    $region28: #{tpu_custom_call.1} parent=5 // pred_fallthru
      _
    %p215 = scmp.le.s32.totalorder 1, %s11
    %p216 = scmp.lt.s32.totalorder %s11, 3
    %p217 = pnand %p215, %p216
    %p218 = pneg %p217
    // Predicated region
    $region37: #{tpu_custom_call.1} parent=5 // pred_check
      _
    $region38: #{tpu_custom_call.1} parent=5 // pred_check_branch
      %220 = sbr.rel (%p217) target = $region40
    $region39: #{tpu_custom_call.1} parent=5 // pred_region
      %s221 = ssub.s32 %s11, 1
      %s222 = smul.u32 32, %s21
      %p223 = scmp.lt.s32.totalorder %s20, 1
      %s224 = scalar_select %p223, %s20, 1
      %p225 = scmp.lt.s32.totalorder %s222, 31
      %s226 = scalar_select %p225, %s222, 31
      %s227 = smul.addr %s224, 32
      %s228 = sadd.s32 %s226, %s227
      %s229 = smul.addr %s228, 8
      %s230 = scalar_lea.vmem %s0, %s229
      %p231 = pneg %p51
      %p232 = pneg %p48
      %p233 = pneg %p72
      %p234 = pneg %p69
      %p235 = pneg %p93
      %p236 = pneg %p90
      %p237 = pneg %p114
      %p238 = pneg %p111
      %p239 = scmp.lt.s32.totalorder %s20, 1
      %s240 = scalar_select %p239, %s20, 1
      %s241 = scalar_lea.vmem %s4, %s240
      %p242 = pneg %p140
      %p243 = pneg %p137
      %p244 = pneg %p168
      %p245 = pneg %p165
      %s246 = smul.u32 32, %s21
      %p247 = scmp.lt.s32.totalorder %s20, 1
      %s248 = scalar_select %p247, %s20, 1
      %p249 = scmp.lt.s32.totalorder %s246, 31
      %s250 = scalar_select %p249, %s246, 31
      %s251 = smul.addr %s248, 32
      %s252 = sadd.s32 %s250, %s251
      %s253 = smul.addr %s252, 8
      %s254 = scalar_lea.vmem %s5, %s253
      %s255 = smul.u32 32, %s21
      %p256 = scmp.lt.s32.totalorder %s20, 1
      %s257 = scalar_select %p256, %s20, 1
      %p258 = scmp.lt.s32.totalorder %s255, 31
      %s259 = scalar_select %p258, %s255, 31
      %s260 = smul.addr %s257, 32
      %s261 = sadd.s32 %s259, %s260
      %s262 = smul.addr %s261, 8
      %s263 = scalar_lea.vmem %s0, %s262
      %s264 = smul.u32 32, %s21
      %p265 = scmp.lt.s32.totalorder %s20, 1
      %s266 = scalar_select %p265, %s20, 1
      %s267 = scalar_lea.vmem %s4, %s266
      %s268 = smul.u32 32, %s21
      %p269 = scmp.lt.s32.totalorder %s20, 1
      %s270 = scalar_select %p269, %s20, 1
      %p271 = scmp.lt.s32.totalorder %s268, 31
      %s272 = scalar_select %p271, %s268, 31
      %s273 = smul.addr %s270, 32
      %s274 = sadd.s32 %s272, %s273
      %s275 = smul.addr %s274, 8
      %s276 = scalar_lea.vmem %s5, %s275
      %s277 = smul.u32 32, %s21
      %v278 = vld [vmem:[%s263] sm:$0xff]
      %v279 = vld [vmem:[%s263 + $0x8] sm:$0xff]
      %v280 = vld [vmem:[%s263 + $0x10] sm:$0xff]
      %v281 = vld [vmem:[%s263 + $0x18] sm:$0xff]
      %v282 = vld [vmem:[%s263 + $0x20] sm:$0xff]
      %v283 = vld [vmem:[%s263 + $0x28] sm:$0xff]
      %v284 = vld [vmem:[%s263 + $0x30] sm:$0xff]
      %v285 = vld [vmem:[%s263 + $0x38] sm:$0xff]
      %v286 = vld [vmem:[%s263 + $0x40] sm:$0xff]
      %v287 = vld [vmem:[%s263 + $0x48] sm:$0xff]
      %v288 = vld [vmem:[%s263 + $0x50] sm:$0xff]
      %v289 = vld [vmem:[%s263 + $0x58] sm:$0xff]
      %v290 = vld [vmem:[%s263 + $0x60] sm:$0xff]
      %v291 = vld [vmem:[%s263 + $0x68] sm:$0xff]
      %v292 = vld [vmem:[%s263 + $0x70] sm:$0xff]
      %v293 = vld [vmem:[%s263 + $0x78] sm:$0xff]
      %v294 = vld [vmem:[%s263 + $0x80] sm:$0xff]
      %v295 = vld [vmem:[%s263 + $0x88] sm:$0xff]
      %v296 = vld [vmem:[%s263 + $0x90] sm:$0xff]
      %v297 = vld [vmem:[%s263 + $0x98] sm:$0xff]
      %v298 = vld [vmem:[%s263 + $0xa0] sm:$0xff]
      %v299 = vld [vmem:[%s263 + $0xa8] sm:$0xff]
      %v300 = vld [vmem:[%s263 + $0xb0] sm:$0xff]
      %v301 = vld [vmem:[%s263 + $0xb8] sm:$0xff]
      %v302 = vld [vmem:[%s263 + $0xc0] sm:$0xff]
      %v303 = vld [vmem:[%s263 + $0xc8] sm:$0xff]
      %v304 = vld [vmem:[%s263 + $0xd0] sm:$0xff]
      %v305 = vld [vmem:[%s263 + $0xd8] sm:$0xff]
      %v306 = vld [vmem:[%s263 + $0xe0] sm:$0xff]
      %v307 = vld [vmem:[%s263 + $0xe8] sm:$0xff]
      %v308 = vld [vmem:[%s263 + $0xf0] sm:$0xff]
      %v309 = vld [vmem:[%s263 + $0xf8] sm:$0xff]
      %v310 = vld [vmem:[%s1] sm:$0xff]
      %v311 = vld [vmem:[%s1 + $0x8] sm:$0xff]
      %v312 = vld [vmem:[%s1 + $0x10] sm:$0xff]
      %v313 = vld [vmem:[%s1 + $0x18] sm:$0xff]
      %v314 = vld [vmem:[%s1 + $0x20] sm:$0xff]
      %v315 = vld [vmem:[%s1 + $0x28] sm:$0xff]
      %v316 = vld [vmem:[%s1 + $0x30] sm:$0xff]
      %v317 = vld [vmem:[%s1 + $0x38] sm:$0xff]
      %v318 = vld [vmem:[%s2] sm:$0x1]
      %v320 = vperm.slane %v318, 0
      %vm322 = vcmask 523264
      %v324 = vsel %vm322, %v278, 0
      %v327 = vsel %vm322, %v279, 0
      %v330 = vsel %vm322, %v280, 0
      %v333 = vsel %vm322, %v281, 0
      %v336 = vsel %vm322, %v282, 0
      %v339 = vsel %vm322, %v283, 0
      %v342 = vsel %vm322, %v284, 0
      %v345 = vsel %vm322, %v285, 0
      %v348 = vsel %vm322, %v286, 0
      %v351 = vsel %vm322, %v287, 0
      %v354 = vsel %vm322, %v288, 0
      %v357 = vsel %vm322, %v289, 0
      %v360 = vsel %vm322, %v290, 0
      %v363 = vsel %vm322, %v291, 0
      %v366 = vsel %vm322, %v292, 0
      %v369 = vsel %vm322, %v293, 0
      %v372 = vsel %vm322, %v294, 0
      %v375 = vsel %vm322, %v295, 0
      %v378 = vsel %vm322, %v296, 0
      %v381 = vsel %vm322, %v297, 0
      %v384 = vsel %vm322, %v298, 0
      %v387 = vsel %vm322, %v299, 0
      %v390 = vsel %vm322, %v300, 0
      %v393 = vsel %vm322, %v301, 0
      %v396 = vsel %vm322, %v302, 0
      %v399 = vsel %vm322, %v303, 0
      %v402 = vsel %vm322, %v304, 0
      %v405 = vsel %vm322, %v305, 0
      %v408 = vsel %vm322, %v306, 0
      %v411 = vsel %vm322, %v307, 0
      %v414 = vsel %vm322, %v308, 0
      %v417 = vsel %vm322, %v309, 0
      %419 = vmatpush.msra.mxu0 0.0
      %420 = vmatpush.msra.mxu0 0.0
      %421 = vmatpush.msra.mxu0 0.0
      %422 = vmatpush.msra.mxu0 0.0
      %423 = vmatpush.msra.mxu0 0.0
      %424 = vmatpush.msra.mxu0 0.0
      %425 = vmatpush.msra.mxu0 0.0
      %426 = vmatpush.msra.mxu0 0.0
      %427 = vmatpush.msra.mxu0 %v317
      %428 = vmatpush.msra.mxu0 %v316
      %429 = vmatpush.msra.mxu0 %v315
      %430 = vmatpush.msra.mxu0 %v314
      %431 = vmatpush.msra.mxu0 %v313
      %432 = vmatpush.msra.mxu0 %v312
      %433 = vmatpush.msra.mxu0 %v311
      %434 = vmatpush.msra.mxu0 %v310
      %435 = vmatmul.f32.gmra.mxu0 %v324
      %v436 = vpop.f32.mrf.mxu0
      %v437 = vadd.f32 %v320, %v436
      %438 = vmatmul.f32.gmra.mxu0 %v327
      %v439 = vpop.f32.mrf.mxu0
      %v440 = vadd.f32 %v320, %v439
      %441 = vmatmul.f32.gmra.mxu0 %v330
      %v442 = vpop.f32.mrf.mxu0
      %v443 = vadd.f32 %v320, %v442
      %444 = vmatmul.f32.gmra.mxu0 %v333
      %v445 = vpop.f32.mrf.mxu0
      %v446 = vadd.f32 %v320, %v445
      %447 = vmatmul.f32.gmra.mxu0 %v336
      %v448 = vpop.f32.mrf.mxu0
      %v449 = vadd.f32 %v320, %v448
      %450 = vmatmul.f32.gmra.mxu0 %v339
      %v451 = vpop.f32.mrf.mxu0
      %v452 = vadd.f32 %v320, %v451
      %453 = vmatmul.f32.gmra.mxu0 %v342
      %v454 = vpop.f32.mrf.mxu0
      %v455 = vadd.f32 %v320, %v454
      %456 = vmatmul.f32.gmra.mxu0 %v345
      %v457 = vpop.f32.mrf.mxu0
      %v458 = vadd.f32 %v320, %v457
      %459 = vmatmul.f32.gmra.mxu0 %v348
      %v460 = vpop.f32.mrf.mxu0
      %v461 = vadd.f32 %v320, %v460
      %462 = vmatmul.f32.gmra.mxu0 %v351
      %v463 = vpop.f32.mrf.mxu0
      %v464 = vadd.f32 %v320, %v463
      %465 = vmatmul.f32.gmra.mxu0 %v354
      %v466 = vpop.f32.mrf.mxu0
      %v467 = vadd.f32 %v320, %v466
      %468 = vmatmul.f32.gmra.mxu0 %v357
      %v469 = vpop.f32.mrf.mxu0
      %v470 = vadd.f32 %v320, %v469
      %471 = vmatmul.f32.gmra.mxu0 %v360
      %v472 = vpop.f32.mrf.mxu0
      %v473 = vadd.f32 %v320, %v472
      %474 = vmatmul.f32.gmra.mxu0 %v363
      %v475 = vpop.f32.mrf.mxu0
      %v476 = vadd.f32 %v320, %v475
      %477 = vmatmul.f32.gmra.mxu0 %v366
      %v478 = vpop.f32.mrf.mxu0
      %v479 = vadd.f32 %v320, %v478
      %480 = vmatmul.f32.gmra.mxu0 %v369
      %v481 = vpop.f32.mrf.mxu0
      %v482 = vadd.f32 %v320, %v481
      %483 = vmatmul.f32.gmra.mxu0 %v372
      %v484 = vpop.f32.mrf.mxu0
      %v485 = vadd.f32 %v320, %v484
      %486 = vmatmul.f32.gmra.mxu0 %v375
      %v487 = vpop.f32.mrf.mxu0
      %v488 = vadd.f32 %v320, %v487
      %489 = vmatmul.f32.gmra.mxu0 %v378
      %v490 = vpop.f32.mrf.mxu0
      %v491 = vadd.f32 %v320, %v490
      %492 = vmatmul.f32.gmra.mxu0 %v381
      %v493 = vpop.f32.mrf.mxu0
      %v494 = vadd.f32 %v320, %v493
      %495 = vmatmul.f32.gmra.mxu0 %v384
      %v496 = vpop.f32.mrf.mxu0
      %v497 = vadd.f32 %v320, %v496
      %498 = vmatmul.f32.gmra.mxu0 %v387
      %v499 = vpop.f32.mrf.mxu0
      %v500 = vadd.f32 %v320, %v499
      %501 = vmatmul.f32.gmra.mxu0 %v390
      %v502 = vpop.f32.mrf.mxu0
      %v503 = vadd.f32 %v320, %v502
      %504 = vmatmul.f32.gmra.mxu0 %v393
      %v505 = vpop.f32.mrf.mxu0
      %v506 = vadd.f32 %v320, %v505
      %507 = vmatmul.f32.gmra.mxu0 %v396
      %v508 = vpop.f32.mrf.mxu0
      %v509 = vadd.f32 %v320, %v508
      %510 = vmatmul.f32.gmra.mxu0 %v399
      %v511 = vpop.f32.mrf.mxu0
      %v512 = vadd.f32 %v320, %v511
      %513 = vmatmul.f32.gmra.mxu0 %v402
      %v514 = vpop.f32.mrf.mxu0
      %v515 = vadd.f32 %v320, %v514
      %516 = vmatmul.f32.gmra.mxu0 %v405
      %v517 = vpop.f32.mrf.mxu0
      %v518 = vadd.f32 %v320, %v517
      %519 = vmatmul.f32.gmra.mxu0 %v408
      %v520 = vpop.f32.mrf.mxu0
      %v521 = vadd.f32 %v320, %v520
      %522 = vmatmul.f32.gmra.mxu0 %v411
      %v523 = vpop.f32.mrf.mxu0
      %v524 = vadd.f32 %v320, %v523
      %525 = vmatmul.f32.gmra.mxu0 %v414
      %v526 = vpop.f32.mrf.mxu0
      %v527 = vadd.f32 %v320, %v526
      %528 = vmatmul.f32.gmra.mxu0 %v417
      %v529 = vpop.f32.mrf.mxu0
      %v530 = vadd.f32 %v320, %v529
      %531 = vdwg.mxu0
      %v532 = vmax.f32 %v437, 0.0
      %v533 = vmax.f32 %v440, 0.0
      %v534 = vmax.f32 %v443, 0.0
      %v535 = vmax.f32 %v446, 0.0
      %v536 = vmax.f32 %v449, 0.0
      %v537 = vmax.f32 %v452, 0.0
      %v538 = vmax.f32 %v455, 0.0
      %v539 = vmax.f32 %v458, 0.0
      %v540 = vmax.f32 %v461, 0.0
      %v541 = vmax.f32 %v464, 0.0
      %v542 = vmax.f32 %v467, 0.0
      %v543 = vmax.f32 %v470, 0.0
      %v544 = vmax.f32 %v473, 0.0
      %v545 = vmax.f32 %v476, 0.0
      %v546 = vmax.f32 %v479, 0.0
      %v547 = vmax.f32 %v482, 0.0
      %v548 = vmax.f32 %v485, 0.0
      %v549 = vmax.f32 %v488, 0.0
      %v550 = vmax.f32 %v491, 0.0
      %v551 = vmax.f32 %v494, 0.0
      %v552 = vmax.f32 %v497, 0.0
      %v553 = vmax.f32 %v500, 0.0
      %v554 = vmax.f32 %v503, 0.0
      %v555 = vmax.f32 %v506, 0.0
      %v556 = vmax.f32 %v509, 0.0
      %v557 = vmax.f32 %v512, 0.0
      %v558 = vmax.f32 %v515, 0.0
      %v559 = vmax.f32 %v518, 0.0
      %v560 = vmax.f32 %v521, 0.0
      %v561 = vmax.f32 %v524, 0.0
      %v562 = vmax.f32 %v527, 0.0
      %v563 = vmax.f32 %v530, 0.0
      %v564 = vld [vmem:[%s3] sm:$0xff]
      %v565 = vld [vmem:[%s3 + $0x8] sm:$0xff]
      %vm566 = vcmask 130048
      %v568 = vsel %vm566, %v532, 0
      %v571 = vsel %vm566, %v533, 0
      %v574 = vsel %vm566, %v534, 0
      %v577 = vsel %vm566, %v535, 0
      %v580 = vsel %vm566, %v536, 0
      %v583 = vsel %vm566, %v537, 0
      %v586 = vsel %vm566, %v538, 0
      %v589 = vsel %vm566, %v539, 0
      %v592 = vsel %vm566, %v540, 0
      %v595 = vsel %vm566, %v541, 0
      %v598 = vsel %vm566, %v542, 0
      %v601 = vsel %vm566, %v543, 0
      %v604 = vsel %vm566, %v544, 0
      %v607 = vsel %vm566, %v545, 0
      %v610 = vsel %vm566, %v546, 0
      %v613 = vsel %vm566, %v547, 0
      %v616 = vsel %vm566, %v548, 0
      %v619 = vsel %vm566, %v549, 0
      %v622 = vsel %vm566, %v550, 0
      %v625 = vsel %vm566, %v551, 0
      %v628 = vsel %vm566, %v552, 0
      %v631 = vsel %vm566, %v553, 0
      %v634 = vsel %vm566, %v554, 0
      %v637 = vsel %vm566, %v555, 0
      %v640 = vsel %vm566, %v556, 0
      %v643 = vsel %vm566, %v557, 0
      %v646 = vsel %vm566, %v558, 0
      %v649 = vsel %vm566, %v559, 0
      %v652 = vsel %vm566, %v560, 0
      %v655 = vsel %vm566, %v561, 0
      %v658 = vsel %vm566, %v562, 0
      %v661 = vsel %vm566, %v563, 0
      %663 = vmatpush.msra.mxu0 0.0
      %664 = vmatpush.msra.mxu0 0.0
      %665 = vmatpush.msra.mxu0 0.0
      %666 = vmatpush.msra.mxu0 0.0
      %667 = vmatpush.msra.mxu0 0.0
      %668 = vmatpush.msra.mxu0 0.0
      %669 = vmatpush.msra.mxu0 0.0
      %670 = vmatpush.msra.mxu0 0.0
      %671 = vmatpush.msra.mxu0 0.0
      %672 = vmatpush.msra.mxu0 0.0
      %673 = vmatpush.msra.mxu0 0.0
      %674 = vmatpush.msra.mxu0 0.0
      %675 = vmatpush.msra.mxu0 0.0
      %676 = vmatpush.msra.mxu0 0.0
      %677 = vmatpush.msra.mxu0 %v565
      %678 = vmatpush.msra.mxu0 %v564
      %679 = vmatmul.f32.gmra.mxu0 %v568
      %v680 = vpop.f32.mrf.mxu0
      %v681 = vadd.f32 0.0, %v680
      %682 = vmatmul.f32.gmra.mxu0 %v571
      %v683 = vpop.f32.mrf.mxu0
      %v684 = vadd.f32 0.0, %v683
      %685 = vmatmul.f32.gmra.mxu0 %v574
      %v686 = vpop.f32.mrf.mxu0
      %v687 = vadd.f32 0.0, %v686
      %688 = vmatmul.f32.gmra.mxu0 %v577
      %v689 = vpop.f32.mrf.mxu0
      %v690 = vadd.f32 0.0, %v689
      %691 = vmatmul.f32.gmra.mxu0 %v580
      %v692 = vpop.f32.mrf.mxu0
      %v693 = vadd.f32 0.0, %v692
      %694 = vmatmul.f32.gmra.mxu0 %v583
      %v695 = vpop.f32.mrf.mxu0
      %v696 = vadd.f32 0.0, %v695
      %697 = vmatmul.f32.gmra.mxu0 %v586
      %v698 = vpop.f32.mrf.mxu0
      %v699 = vadd.f32 0.0, %v698
      %700 = vmatmul.f32.gmra.mxu0 %v589
      %v701 = vpop.f32.mrf.mxu0
      %v702 = vadd.f32 0.0, %v701
      %703 = vmatmul.f32.gmra.mxu0 %v592
      %v704 = vpop.f32.mrf.mxu0
      %v705 = vadd.f32 0.0, %v704
      %706 = vmatmul.f32.gmra.mxu0 %v595
      %v707 = vpop.f32.mrf.mxu0
      %v708 = vadd.f32 0.0, %v707
      %709 = vmatmul.f32.gmra.mxu0 %v598
      %v710 = vpop.f32.mrf.mxu0
      %v711 = vadd.f32 0.0, %v710
      %712 = vmatmul.f32.gmra.mxu0 %v601
      %v713 = vpop.f32.mrf.mxu0
      %v714 = vadd.f32 0.0, %v713
      %715 = vmatmul.f32.gmra.mxu0 %v604
      %v716 = vpop.f32.mrf.mxu0
      %v717 = vadd.f32 0.0, %v716
      %718 = vmatmul.f32.gmra.mxu0 %v607
      %v719 = vpop.f32.mrf.mxu0
      %v720 = vadd.f32 0.0, %v719
      %721 = vmatmul.f32.gmra.mxu0 %v610
      %v722 = vpop.f32.mrf.mxu0
      %v723 = vadd.f32 0.0, %v722
      %724 = vmatmul.f32.gmra.mxu0 %v613
      %v725 = vpop.f32.mrf.mxu0
      %v726 = vadd.f32 0.0, %v725
      %727 = vmatmul.f32.gmra.mxu0 %v616
      %v728 = vpop.f32.mrf.mxu0
      %v729 = vadd.f32 0.0, %v728
      %730 = vmatmul.f32.gmra.mxu0 %v619
      %v731 = vpop.f32.mrf.mxu0
      %v732 = vadd.f32 0.0, %v731
      %733 = vmatmul.f32.gmra.mxu0 %v622
      %v734 = vpop.f32.mrf.mxu0
      %v735 = vadd.f32 0.0, %v734
      %736 = vmatmul.f32.gmra.mxu0 %v625
      %v737 = vpop.f32.mrf.mxu0
      %v738 = vadd.f32 0.0, %v737
      %739 = vmatmul.f32.gmra.mxu0 %v628
      %v740 = vpop.f32.mrf.mxu0
      %v741 = vadd.f32 0.0, %v740
      %742 = vmatmul.f32.gmra.mxu0 %v631
      %v743 = vpop.f32.mrf.mxu0
      %v744 = vadd.f32 0.0, %v743
      %745 = vmatmul.f32.gmra.mxu0 %v634
      %v746 = vpop.f32.mrf.mxu0
      %v747 = vadd.f32 0.0, %v746
      %748 = vmatmul.f32.gmra.mxu0 %v637
      %v749 = vpop.f32.mrf.mxu0
      %v750 = vadd.f32 0.0, %v749
      %751 = vmatmul.f32.gmra.mxu0 %v640
      %v752 = vpop.f32.mrf.mxu0
      %v753 = vadd.f32 0.0, %v752
      %754 = vmatmul.f32.gmra.mxu0 %v643
      %v755 = vpop.f32.mrf.mxu0
      %v756 = vadd.f32 0.0, %v755
      %757 = vmatmul.f32.gmra.mxu0 %v646
      %v758 = vpop.f32.mrf.mxu0
      %v759 = vadd.f32 0.0, %v758
      %760 = vmatmul.f32.gmra.mxu0 %v649
      %v761 = vpop.f32.mrf.mxu0
      %v762 = vadd.f32 0.0, %v761
      %763 = vmatmul.f32.gmra.mxu0 %v652
      %v764 = vpop.f32.mrf.mxu0
      %v765 = vadd.f32 0.0, %v764
      %766 = vmatmul.f32.gmra.mxu0 %v655
      %v767 = vpop.f32.mrf.mxu0
      %v768 = vadd.f32 0.0, %v767
      %769 = vmatmul.f32.gmra.mxu0 %v658
      %v770 = vpop.f32.mrf.mxu0
      %v771 = vadd.f32 0.0, %v770
      %772 = vmatmul.f32.gmra.mxu0 %v661
      %v773 = vpop.f32.mrf.mxu0
      %v774 = vadd.f32 0.0, %v773
      %775 = vdwg.mxu0
      %v776 = vld [vmem:[%s267] sm:$0x1]
      %v778 = vperm.slane %v776, 0
      %v780 = vadd.f32 %v681, %v778
      %v781 = vadd.f32 %v684, %v778
      %v782 = vadd.f32 %v687, %v778
      %v783 = vadd.f32 %v690, %v778
      %v784 = vadd.f32 %v693, %v778
      %v785 = vadd.f32 %v696, %v778
      %v786 = vadd.f32 %v699, %v778
      %v787 = vadd.f32 %v702, %v778
      %v788 = vadd.f32 %v705, %v778
      %v789 = vadd.f32 %v708, %v778
      %v790 = vadd.f32 %v711, %v778
      %v791 = vadd.f32 %v714, %v778
      %v792 = vadd.f32 %v717, %v778
      %v793 = vadd.f32 %v720, %v778
      %v794 = vadd.f32 %v723, %v778
      %v795 = vadd.f32 %v726, %v778
      %v796 = vadd.f32 %v729, %v778
      %v797 = vadd.f32 %v732, %v778
      %v798 = vadd.f32 %v735, %v778
      %v799 = vadd.f32 %v738, %v778
      %v800 = vadd.f32 %v741, %v778
      %v801 = vadd.f32 %v744, %v778
      %v802 = vadd.f32 %v747, %v778
      %v803 = vadd.f32 %v750, %v778
      %v804 = vadd.f32 %v753, %v778
      %v805 = vadd.f32 %v756, %v778
      %v806 = vadd.f32 %v759, %v778
      %v807 = vadd.f32 %v762, %v778
      %v808 = vadd.f32 %v765, %v778
      %v809 = vadd.f32 %v768, %v778
      %v810 = vadd.f32 %v771, %v778
      %v811 = vadd.f32 %v774, %v778
      %v812 = vxor.u32 %v780, 2147483648
      %v813 = vxor.u32 %v781, 2147483648
      %v814 = vxor.u32 %v782, 2147483648
      %v815 = vxor.u32 %v783, 2147483648
      %v816 = vxor.u32 %v784, 2147483648
      %v817 = vxor.u32 %v785, 2147483648
      %v818 = vxor.u32 %v786, 2147483648
      %v819 = vxor.u32 %v787, 2147483648
      %v820 = vxor.u32 %v788, 2147483648
      %v821 = vxor.u32 %v789, 2147483648
      %v822 = vxor.u32 %v790, 2147483648
      %v823 = vxor.u32 %v791, 2147483648
      %v824 = vxor.u32 %v792, 2147483648
      %v825 = vxor.u32 %v793, 2147483648
      %v826 = vxor.u32 %v794, 2147483648
      %v827 = vxor.u32 %v795, 2147483648
      %v828 = vxor.u32 %v796, 2147483648
      %v829 = vxor.u32 %v797, 2147483648
      %v830 = vxor.u32 %v798, 2147483648
      %v831 = vxor.u32 %v799, 2147483648
      %v832 = vxor.u32 %v800, 2147483648
      %v833 = vxor.u32 %v801, 2147483648
      %v834 = vxor.u32 %v802, 2147483648
      %v835 = vxor.u32 %v803, 2147483648
      %v836 = vxor.u32 %v804, 2147483648
      %v837 = vxor.u32 %v805, 2147483648
      %v838 = vxor.u32 %v806, 2147483648
      %v839 = vxor.u32 %v807, 2147483648
      %v840 = vxor.u32 %v808, 2147483648
      %v841 = vxor.u32 %v809, 2147483648
      %v842 = vxor.u32 %v810, 2147483648
      %v843 = vxor.u32 %v811, 2147483648
      %v844 = vmul.f32 %v812, 1.442695
      %v845 = vpow.pop %v844
      %v846 = vmul.f32 %v813, 1.442695
      %v847 = vpow.pop %v846
      %v848 = vmul.f32 %v814, 1.442695
      %v849 = vpow.pop %v848
      %v850 = vmul.f32 %v815, 1.442695
      %v851 = vpow.pop %v850
      %v852 = vmul.f32 %v816, 1.442695
      %v853 = vpow.pop %v852
      %v854 = vmul.f32 %v817, 1.442695
      %v855 = vpow.pop %v854
      %v856 = vmul.f32 %v818, 1.442695
      %v857 = vpow.pop %v856
      %v858 = vmul.f32 %v819, 1.442695
      %v859 = vpow.pop %v858
      %v860 = vmul.f32 %v820, 1.442695
      %v861 = vpow.pop %v860
      %v862 = vmul.f32 %v821, 1.442695
      %v863 = vpow.pop %v862
      %v864 = vmul.f32 %v822, 1.442695
      %v865 = vpow.pop %v864
      %v866 = vmul.f32 %v823, 1.442695
      %v867 = vpow.pop %v866
      %v868 = vmul.f32 %v824, 1.442695
      %v869 = vpow.pop %v868
      %v870 = vmul.f32 %v825, 1.442695
      %v871 = vpow.pop %v870
      %v872 = vmul.f32 %v826, 1.442695
      %v873 = vpow.pop %v872
      %v874 = vmul.f32 %v827, 1.442695
      %v875 = vpow.pop %v874
      %v876 = vmul.f32 %v828, 1.442695
      %v877 = vpow.pop %v876
      %v878 = vmul.f32 %v829, 1.442695
      %v879 = vpow.pop %v878
      %v880 = vmul.f32 %v830, 1.442695
      %v881 = vpow.pop %v880
      %v882 = vmul.f32 %v831, 1.442695
      %v883 = vpow.pop %v882
      %v884 = vmul.f32 %v832, 1.442695
      %v885 = vpow.pop %v884
      %v886 = vmul.f32 %v833, 1.442695
      %v887 = vpow.pop %v886
      %v888 = vmul.f32 %v834, 1.442695
      %v889 = vpow.pop %v888
      %v890 = vmul.f32 %v835, 1.442695
      %v891 = vpow.pop %v890
      %v892 = vmul.f32 %v836, 1.442695
      %v893 = vpow.pop %v892
      %v894 = vmul.f32 %v837, 1.442695
      %v895 = vpow.pop %v894
      %v896 = vmul.f32 %v838, 1.442695
      %v897 = vpow.pop %v896
      %v898 = vmul.f32 %v839, 1.442695
      %v899 = vpow.pop %v898
      %v900 = vmul.f32 %v840, 1.442695
      %v901 = vpow.pop %v900
      %v902 = vmul.f32 %v841, 1.442695
      %v903 = vpow.pop %v902
      %v904 = vmul.f32 %v842, 1.442695
      %v905 = vpow.pop %v904
      %v906 = vmul.f32 %v843, 1.442695
      %v907 = vpow.pop %v906
      %v908 = vadd.f32 %v845, 1.0
      %v909 = vadd.f32 %v847, 1.0
      %v910 = vadd.f32 %v849, 1.0
      %v911 = vadd.f32 %v851, 1.0
      %v912 = vadd.f32 %v853, 1.0
      %v913 = vadd.f32 %v855, 1.0
      %v914 = vadd.f32 %v857, 1.0
      %v915 = vadd.f32 %v859, 1.0
      %v916 = vadd.f32 %v861, 1.0
      %v917 = vadd.f32 %v863, 1.0
      %v918 = vadd.f32 %v865, 1.0
      %v919 = vadd.f32 %v867, 1.0
      %v920 = vadd.f32 %v869, 1.0
      %v921 = vadd.f32 %v871, 1.0
      %v922 = vadd.f32 %v873, 1.0
      %v923 = vadd.f32 %v875, 1.0
      %v924 = vadd.f32 %v877, 1.0
      %v925 = vadd.f32 %v879, 1.0
      %v926 = vadd.f32 %v881, 1.0
      %v927 = vadd.f32 %v883, 1.0
      %v928 = vadd.f32 %v885, 1.0
      %v929 = vadd.f32 %v887, 1.0
      %v930 = vadd.f32 %v889, 1.0
      %v931 = vadd.f32 %v891, 1.0
      %v932 = vadd.f32 %v893, 1.0
      %v933 = vadd.f32 %v895, 1.0
      %v934 = vadd.f32 %v897, 1.0
      %v935 = vadd.f32 %v899, 1.0
      %v936 = vadd.f32 %v901, 1.0
      %v937 = vadd.f32 %v903, 1.0
      %v938 = vadd.f32 %v905, 1.0
      %v939 = vadd.f32 %v907, 1.0
      %v940 = vrcp.pop %v908
      %v941 = vmul.f32 %v908, %v940
      %v942 = vsub.f32 1.0, %v941
      %v943 = vmul.f32 %v940, %v942
      %v944 = vadd.f32 %v940, %v943
      %vm945 = vweird.f32 %v908
      %vm946 = vweird.f32 %v940
      %vm947 = vmor %vm945, %vm946
      %v948 = vsel %vm947, %v940, %v944
      %v949 = vand.u32 2147483647, %v908
      %vm950 = vcmp.eq.f32.partialorder %v949, 8.507059e+37
      %v951 = vand.u32 %v908, 2147483648
      %v952 = vor.u32 1.1754944e-38, %v951
      %v953 = vsel %vm950, %v952, %v948
      %v954 = vmul.f32 1.0, %v953
      %v955 = vrcp.pop %v909
      %v956 = vmul.f32 %v909, %v955
      %v957 = vsub.f32 1.0, %v956
      %v958 = vmul.f32 %v955, %v957
      %v959 = vadd.f32 %v955, %v958
      %vm960 = vweird.f32 %v909
      %vm961 = vweird.f32 %v955
      %vm962 = vmor %vm960, %vm961
      %v963 = vsel %vm962, %v955, %v959
      %v964 = vand.u32 2147483647, %v909
      %vm965 = vcmp.eq.f32.partialorder %v964, 8.507059e+37
      %v966 = vand.u32 %v909, 2147483648
      %v967 = vor.u32 1.1754944e-38, %v966
      %v968 = vsel %vm965, %v967, %v963
      %v969 = vmul.f32 1.0, %v968
      %v970 = vrcp.pop %v910
      %v971 = vmul.f32 %v910, %v970
      %v972 = vsub.f32 1.0, %v971
      %v973 = vmul.f32 %v970, %v972
      %v974 = vadd.f32 %v970, %v973
      %vm975 = vweird.f32 %v910
      %vm976 = vweird.f32 %v970
      %vm977 = vmor %vm975, %vm976
      %v978 = vsel %vm977, %v970, %v974
      %v979 = vand.u32 2147483647, %v910
      %vm980 = vcmp.eq.f32.partialorder %v979, 8.507059e+37
      %v981 = vand.u32 %v910, 2147483648
      %v982 = vor.u32 1.1754944e-38, %v981
      %v983 = vsel %vm980, %v982, %v978
      %v984 = vmul.f32 1.0, %v983
      %v985 = vrcp.pop %v911
      %v986 = vmul.f32 %v911, %v985
      %v987 = vsub.f32 1.0, %v986
      %v988 = vmul.f32 %v985, %v987
      %v989 = vadd.f32 %v985, %v988
      %vm990 = vweird.f32 %v911
      %vm991 = vweird.f32 %v985
      %vm992 = vmor %vm990, %vm991
      %v993 = vsel %vm992, %v985, %v989
      %v994 = vand.u32 2147483647, %v911
      %vm995 = vcmp.eq.f32.partialorder %v994, 8.507059e+37
      %v996 = vand.u32 %v911, 2147483648
      %v997 = vor.u32 1.1754944e-38, %v996
      %v998 = vsel %vm995, %v997, %v993
      %v999 = vmul.f32 1.0, %v998
      %v1000 = vrcp.pop %v912
      %v1001 = vmul.f32 %v912, %v1000
      %v1002 = vsub.f32 1.0, %v1001
      %v1003 = vmul.f32 %v1000, %v1002
      %v1004 = vadd.f32 %v1000, %v1003
      %vm1005 = vweird.f32 %v912
      %vm1006 = vweird.f32 %v1000
      %vm1007 = vmor %vm1005, %vm1006
      %v1008 = vsel %vm1007, %v1000, %v1004
      %v1009 = vand.u32 2147483647, %v912
      %vm1010 = vcmp.eq.f32.partialorder %v1009, 8.507059e+37
      %v1011 = vand.u32 %v912, 2147483648
      %v1012 = vor.u32 1.1754944e-38, %v1011
      %v1013 = vsel %vm1010, %v1012, %v1008
      %v1014 = vmul.f32 1.0, %v1013
      %v1015 = vrcp.pop %v913
      %v1016 = vmul.f32 %v913, %v1015
      %v1017 = vsub.f32 1.0, %v1016
      %v1018 = vmul.f32 %v1015, %v1017
      %v1019 = vadd.f32 %v1015, %v1018
      %vm1020 = vweird.f32 %v913
      %vm1021 = vweird.f32 %v1015
      %vm1022 = vmor %vm1020, %vm1021
      %v1023 = vsel %vm1022, %v1015, %v1019
      %v1024 = vand.u32 2147483647, %v913
      %vm1025 = vcmp.eq.f32.partialorder %v1024, 8.507059e+37
      %v1026 = vand.u32 %v913, 2147483648
      %v1027 = vor.u32 1.1754944e-38, %v1026
      %v1028 = vsel %vm1025, %v1027, %v1023
      %v1029 = vmul.f32 1.0, %v1028
      %v1030 = vrcp.pop %v914
      %v1031 = vmul.f32 %v914, %v1030
      %v1032 = vsub.f32 1.0, %v1031
      %v1033 = vmul.f32 %v1030, %v1032
      %v1034 = vadd.f32 %v1030, %v1033
      %vm1035 = vweird.f32 %v914
      %vm1036 = vweird.f32 %v1030
      %vm1037 = vmor %vm1035, %vm1036
      %v1038 = vsel %vm1037, %v1030, %v1034
      %v1039 = vand.u32 2147483647, %v914
      %vm1040 = vcmp.eq.f32.partialorder %v1039, 8.507059e+37
      %v1041 = vand.u32 %v914, 2147483648
      %v1042 = vor.u32 1.1754944e-38, %v1041
      %v1043 = vsel %vm1040, %v1042, %v1038
      %v1044 = vmul.f32 1.0, %v1043
      %v1045 = vrcp.pop %v915
      %v1046 = vmul.f32 %v915, %v1045
      %v1047 = vsub.f32 1.0, %v1046
      %v1048 = vmul.f32 %v1045, %v1047
      %v1049 = vadd.f32 %v1045, %v1048
      %vm1050 = vweird.f32 %v915
      %vm1051 = vweird.f32 %v1045
      %vm1052 = vmor %vm1050, %vm1051
      %v1053 = vsel %vm1052, %v1045, %v1049
      %v1054 = vand.u32 2147483647, %v915
      %vm1055 = vcmp.eq.f32.partialorder %v1054, 8.507059e+37
      %v1056 = vand.u32 %v915, 2147483648
      %v1057 = vor.u32 1.1754944e-38, %v1056
      %v1058 = vsel %vm1055, %v1057, %v1053
      %v1059 = vmul.f32 1.0, %v1058
      %v1060 = vrcp.pop %v916
      %v1061 = vmul.f32 %v916, %v1060
      %v1062 = vsub.f32 1.0, %v1061
      %v1063 = vmul.f32 %v1060, %v1062
      %v1064 = vadd.f32 %v1060, %v1063
      %vm1065 = vweird.f32 %v916
      %vm1066 = vweird.f32 %v1060
      %vm1067 = vmor %vm1065, %vm1066
      %v1068 = vsel %vm1067, %v1060, %v1064
      %v1069 = vand.u32 2147483647, %v916
      %vm1070 = vcmp.eq.f32.partialorder %v1069, 8.507059e+37
      %v1071 = vand.u32 %v916, 2147483648
      %v1072 = vor.u32 1.1754944e-38, %v1071
      %v1073 = vsel %vm1070, %v1072, %v1068
      %v1074 = vmul.f32 1.0, %v1073
      %v1075 = vrcp.pop %v917
      %v1076 = vmul.f32 %v917, %v1075
      %v1077 = vsub.f32 1.0, %v1076
      %v1078 = vmul.f32 %v1075, %v1077
      %v1079 = vadd.f32 %v1075, %v1078
      %vm1080 = vweird.f32 %v917
      %vm1081 = vweird.f32 %v1075
      %vm1082 = vmor %vm1080, %vm1081
      %v1083 = vsel %vm1082, %v1075, %v1079
      %v1084 = vand.u32 2147483647, %v917
      %vm1085 = vcmp.eq.f32.partialorder %v1084, 8.507059e+37
      %v1086 = vand.u32 %v917, 2147483648
      %v1087 = vor.u32 1.1754944e-38, %v1086
      %v1088 = vsel %vm1085, %v1087, %v1083
      %v1089 = vmul.f32 1.0, %v1088
      %v1090 = vrcp.pop %v918
      %v1091 = vmul.f32 %v918, %v1090
      %v1092 = vsub.f32 1.0, %v1091
      %v1093 = vmul.f32 %v1090, %v1092
      %v1094 = vadd.f32 %v1090, %v1093
      %vm1095 = vweird.f32 %v918
      %vm1096 = vweird.f32 %v1090
      %vm1097 = vmor %vm1095, %vm1096
      %v1098 = vsel %vm1097, %v1090, %v1094
      %v1099 = vand.u32 2147483647, %v918
      %vm1100 = vcmp.eq.f32.partialorder %v1099, 8.507059e+37
      %v1101 = vand.u32 %v918, 2147483648
      %v1102 = vor.u32 1.1754944e-38, %v1101
      %v1103 = vsel %vm1100, %v1102, %v1098
      %v1104 = vmul.f32 1.0, %v1103
      %v1105 = vrcp.pop %v919
      %v1106 = vmul.f32 %v919, %v1105
      %v1107 = vsub.f32 1.0, %v1106
      %v1108 = vmul.f32 %v1105, %v1107
      %v1109 = vadd.f32 %v1105, %v1108
      %vm1110 = vweird.f32 %v919
      %vm1111 = vweird.f32 %v1105
      %vm1112 = vmor %vm1110, %vm1111
      %v1113 = vsel %vm1112, %v1105, %v1109
      %v1114 = vand.u32 2147483647, %v919
      %vm1115 = vcmp.eq.f32.partialorder %v1114, 8.507059e+37
      %v1116 = vand.u32 %v919, 2147483648
      %v1117 = vor.u32 1.1754944e-38, %v1116
      %v1118 = vsel %vm1115, %v1117, %v1113
      %v1119 = vmul.f32 1.0, %v1118
      %v1120 = vrcp.pop %v920
      %v1121 = vmul.f32 %v920, %v1120
      %v1122 = vsub.f32 1.0, %v1121
      %v1123 = vmul.f32 %v1120, %v1122
      %v1124 = vadd.f32 %v1120, %v1123
      %vm1125 = vweird.f32 %v920
      %vm1126 = vweird.f32 %v1120
      %vm1127 = vmor %vm1125, %vm1126
      %v1128 = vsel %vm1127, %v1120, %v1124
      %v1129 = vand.u32 2147483647, %v920
      %vm1130 = vcmp.eq.f32.partialorder %v1129, 8.507059e+37
      %v1131 = vand.u32 %v920, 2147483648
      %v1132 = vor.u32 1.1754944e-38, %v1131
      %v1133 = vsel %vm1130, %v1132, %v1128
      %v1134 = vmul.f32 1.0, %v1133
      %v1135 = vrcp.pop %v921
      %v1136 = vmul.f32 %v921, %v1135
      %v1137 = vsub.f32 1.0, %v1136
      %v1138 = vmul.f32 %v1135, %v1137
      %v1139 = vadd.f32 %v1135, %v1138
      %vm1140 = vweird.f32 %v921
      %vm1141 = vweird.f32 %v1135
      %vm1142 = vmor %vm1140, %vm1141
      %v1143 = vsel %vm1142, %v1135, %v1139
      %v1144 = vand.u32 2147483647, %v921
      %vm1145 = vcmp.eq.f32.partialorder %v1144, 8.507059e+37
      %v1146 = vand.u32 %v921, 2147483648
      %v1147 = vor.u32 1.1754944e-38, %v1146
      %v1148 = vsel %vm1145, %v1147, %v1143
      %v1149 = vmul.f32 1.0, %v1148
      %v1150 = vrcp.pop %v922
      %v1151 = vmul.f32 %v922, %v1150
      %v1152 = vsub.f32 1.0, %v1151
      %v1153 = vmul.f32 %v1150, %v1152
      %v1154 = vadd.f32 %v1150, %v1153
      %vm1155 = vweird.f32 %v922
      %vm1156 = vweird.f32 %v1150
      %vm1157 = vmor %vm1155, %vm1156
      %v1158 = vsel %vm1157, %v1150, %v1154
      %v1159 = vand.u32 2147483647, %v922
      %vm1160 = vcmp.eq.f32.partialorder %v1159, 8.507059e+37
      %v1161 = vand.u32 %v922, 2147483648
      %v1162 = vor.u32 1.1754944e-38, %v1161
      %v1163 = vsel %vm1160, %v1162, %v1158
      %v1164 = vmul.f32 1.0, %v1163
      %v1165 = vrcp.pop %v923
      %v1166 = vmul.f32 %v923, %v1165
      %v1167 = vsub.f32 1.0, %v1166
      %v1168 = vmul.f32 %v1165, %v1167
      %v1169 = vadd.f32 %v1165, %v1168
      %vm1170 = vweird.f32 %v923
      %vm1171 = vweird.f32 %v1165
      %vm1172 = vmor %vm1170, %vm1171
      %v1173 = vsel %vm1172, %v1165, %v1169
      %v1174 = vand.u32 2147483647, %v923
      %vm1175 = vcmp.eq.f32.partialorder %v1174, 8.507059e+37
      %v1176 = vand.u32 %v923, 2147483648
      %v1177 = vor.u32 1.1754944e-38, %v1176
      %v1178 = vsel %vm1175, %v1177, %v1173
      %v1179 = vmul.f32 1.0, %v1178
      %v1180 = vrcp.pop %v924
      %v1181 = vmul.f32 %v924, %v1180
      %v1182 = vsub.f32 1.0, %v1181
      %v1183 = vmul.f32 %v1180, %v1182
      %v1184 = vadd.f32 %v1180, %v1183
      %vm1185 = vweird.f32 %v924
      %vm1186 = vweird.f32 %v1180
      %vm1187 = vmor %vm1185, %vm1186
      %v1188 = vsel %vm1187, %v1180, %v1184
      %v1189 = vand.u32 2147483647, %v924
      %vm1190 = vcmp.eq.f32.partialorder %v1189, 8.507059e+37
      %v1191 = vand.u32 %v924, 2147483648
      %v1192 = vor.u32 1.1754944e-38, %v1191
      %v1193 = vsel %vm1190, %v1192, %v1188
      %v1194 = vmul.f32 1.0, %v1193
      %v1195 = vrcp.pop %v925
      %v1196 = vmul.f32 %v925, %v1195
      %v1197 = vsub.f32 1.0, %v1196
      %v1198 = vmul.f32 %v1195, %v1197
      %v1199 = vadd.f32 %v1195, %v1198
      %vm1200 = vweird.f32 %v925
      %vm1201 = vweird.f32 %v1195
      %vm1202 = vmor %vm1200, %vm1201
      %v1203 = vsel %vm1202, %v1195, %v1199
      %v1204 = vand.u32 2147483647, %v925
      %vm1205 = vcmp.eq.f32.partialorder %v1204, 8.507059e+37
      %v1206 = vand.u32 %v925, 2147483648
      %v1207 = vor.u32 1.1754944e-38, %v1206
      %v1208 = vsel %vm1205, %v1207, %v1203
      %v1209 = vmul.f32 1.0, %v1208
      %v1210 = vrcp.pop %v926
      %v1211 = vmul.f32 %v926, %v1210
      %v1212 = vsub.f32 1.0, %v1211
      %v1213 = vmul.f32 %v1210, %v1212
      %v1214 = vadd.f32 %v1210, %v1213
      %vm1215 = vweird.f32 %v926
      %vm1216 = vweird.f32 %v1210
      %vm1217 = vmor %vm1215, %vm1216
      %v1218 = vsel %vm1217, %v1210, %v1214
      %v1219 = vand.u32 2147483647, %v926
      %vm1220 = vcmp.eq.f32.partialorder %v1219, 8.507059e+37
      %v1221 = vand.u32 %v926, 2147483648
      %v1222 = vor.u32 1.1754944e-38, %v1221
      %v1223 = vsel %vm1220, %v1222, %v1218
      %v1224 = vmul.f32 1.0, %v1223
      %v1225 = vrcp.pop %v927
      %v1226 = vmul.f32 %v927, %v1225
      %v1227 = vsub.f32 1.0, %v1226
      %v1228 = vmul.f32 %v1225, %v1227
      %v1229 = vadd.f32 %v1225, %v1228
      %vm1230 = vweird.f32 %v927
      %vm1231 = vweird.f32 %v1225
      %vm1232 = vmor %vm1230, %vm1231
      %v1233 = vsel %vm1232, %v1225, %v1229
      %v1234 = vand.u32 2147483647, %v927
      %vm1235 = vcmp.eq.f32.partialorder %v1234, 8.507059e+37
      %v1236 = vand.u32 %v927, 2147483648
      %v1237 = vor.u32 1.1754944e-38, %v1236
      %v1238 = vsel %vm1235, %v1237, %v1233
      %v1239 = vmul.f32 1.0, %v1238
      %v1240 = vrcp.pop %v928
      %v1241 = vmul.f32 %v928, %v1240
      %v1242 = vsub.f32 1.0, %v1241
      %v1243 = vmul.f32 %v1240, %v1242
      %v1244 = vadd.f32 %v1240, %v1243
      %vm1245 = vweird.f32 %v928
      %vm1246 = vweird.f32 %v1240
      %vm1247 = vmor %vm1245, %vm1246
      %v1248 = vsel %vm1247, %v1240, %v1244
      %v1249 = vand.u32 2147483647, %v928
      %vm1250 = vcmp.eq.f32.partialorder %v1249, 8.507059e+37
      %v1251 = vand.u32 %v928, 2147483648
      %v1252 = vor.u32 1.1754944e-38, %v1251
      %v1253 = vsel %vm1250, %v1252, %v1248
      %v1254 = vmul.f32 1.0, %v1253
      %v1255 = vrcp.pop %v929
      %v1256 = vmul.f32 %v929, %v1255
      %v1257 = vsub.f32 1.0, %v1256
      %v1258 = vmul.f32 %v1255, %v1257
      %v1259 = vadd.f32 %v1255, %v1258
      %vm1260 = vweird.f32 %v929
      %vm1261 = vweird.f32 %v1255
      %vm1262 = vmor %vm1260, %vm1261
      %v1263 = vsel %vm1262, %v1255, %v1259
      %v1264 = vand.u32 2147483647, %v929
      %vm1265 = vcmp.eq.f32.partialorder %v1264, 8.507059e+37
      %v1266 = vand.u32 %v929, 2147483648
      %v1267 = vor.u32 1.1754944e-38, %v1266
      %v1268 = vsel %vm1265, %v1267, %v1263
      %v1269 = vmul.f32 1.0, %v1268
      %v1270 = vrcp.pop %v930
      %v1271 = vmul.f32 %v930, %v1270
      %v1272 = vsub.f32 1.0, %v1271
      %v1273 = vmul.f32 %v1270, %v1272
      %v1274 = vadd.f32 %v1270, %v1273
      %vm1275 = vweird.f32 %v930
      %vm1276 = vweird.f32 %v1270
      %vm1277 = vmor %vm1275, %vm1276
      %v1278 = vsel %vm1277, %v1270, %v1274
      %v1279 = vand.u32 2147483647, %v930
      %vm1280 = vcmp.eq.f32.partialorder %v1279, 8.507059e+37
      %v1281 = vand.u32 %v930, 2147483648
      %v1282 = vor.u32 1.1754944e-38, %v1281
      %v1283 = vsel %vm1280, %v1282, %v1278
      %v1284 = vmul.f32 1.0, %v1283
      %v1285 = vrcp.pop %v931
      %v1286 = vmul.f32 %v931, %v1285
      %v1287 = vsub.f32 1.0, %v1286
      %v1288 = vmul.f32 %v1285, %v1287
      %v1289 = vadd.f32 %v1285, %v1288
      %vm1290 = vweird.f32 %v931
      %vm1291 = vweird.f32 %v1285
      %vm1292 = vmor %vm1290, %vm1291
      %v1293 = vsel %vm1292, %v1285, %v1289
      %v1294 = vand.u32 2147483647, %v931
      %vm1295 = vcmp.eq.f32.partialorder %v1294, 8.507059e+37
      %v1296 = vand.u32 %v931, 2147483648
      %v1297 = vor.u32 1.1754944e-38, %v1296
      %v1298 = vsel %vm1295, %v1297, %v1293
      %v1299 = vmul.f32 1.0, %v1298
      %v1300 = vrcp.pop %v932
      %v1301 = vmul.f32 %v932, %v1300
      %v1302 = vsub.f32 1.0, %v1301
      %v1303 = vmul.f32 %v1300, %v1302
      %v1304 = vadd.f32 %v1300, %v1303
      %vm1305 = vweird.f32 %v932
      %vm1306 = vweird.f32 %v1300
      %vm1307 = vmor %vm1305, %vm1306
      %v1308 = vsel %vm1307, %v1300, %v1304
      %v1309 = vand.u32 2147483647, %v932
      %vm1310 = vcmp.eq.f32.partialorder %v1309, 8.507059e+37
      %v1311 = vand.u32 %v932, 2147483648
      %v1312 = vor.u32 1.1754944e-38, %v1311
      %v1313 = vsel %vm1310, %v1312, %v1308
      %v1314 = vmul.f32 1.0, %v1313
      %v1315 = vrcp.pop %v933
      %v1316 = vmul.f32 %v933, %v1315
      %v1317 = vsub.f32 1.0, %v1316
      %v1318 = vmul.f32 %v1315, %v1317
      %v1319 = vadd.f32 %v1315, %v1318
      %vm1320 = vweird.f32 %v933
      %vm1321 = vweird.f32 %v1315
      %vm1322 = vmor %vm1320, %vm1321
      %v1323 = vsel %vm1322, %v1315, %v1319
      %v1324 = vand.u32 2147483647, %v933
      %vm1325 = vcmp.eq.f32.partialorder %v1324, 8.507059e+37
      %v1326 = vand.u32 %v933, 2147483648
      %v1327 = vor.u32 1.1754944e-38, %v1326
      %v1328 = vsel %vm1325, %v1327, %v1323
      %v1329 = vmul.f32 1.0, %v1328
      %v1330 = vrcp.pop %v934
      %v1331 = vmul.f32 %v934, %v1330
      %v1332 = vsub.f32 1.0, %v1331
      %v1333 = vmul.f32 %v1330, %v1332
      %v1334 = vadd.f32 %v1330, %v1333
      %vm1335 = vweird.f32 %v934
      %vm1336 = vweird.f32 %v1330
      %vm1337 = vmor %vm1335, %vm1336
      %v1338 = vsel %vm1337, %v1330, %v1334
      %v1339 = vand.u32 2147483647, %v934
      %vm1340 = vcmp.eq.f32.partialorder %v1339, 8.507059e+37
      %v1341 = vand.u32 %v934, 2147483648
      %v1342 = vor.u32 1.1754944e-38, %v1341
      %v1343 = vsel %vm1340, %v1342, %v1338
      %v1344 = vmul.f32 1.0, %v1343
      %v1345 = vrcp.pop %v935
      %v1346 = vmul.f32 %v935, %v1345
      %v1347 = vsub.f32 1.0, %v1346
      %v1348 = vmul.f32 %v1345, %v1347
      %v1349 = vadd.f32 %v1345, %v1348
      %vm1350 = vweird.f32 %v935
      %vm1351 = vweird.f32 %v1345
      %vm1352 = vmor %vm1350, %vm1351
      %v1353 = vsel %vm1352, %v1345, %v1349
      %v1354 = vand.u32 2147483647, %v935
      %vm1355 = vcmp.eq.f32.partialorder %v1354, 8.507059e+37
      %v1356 = vand.u32 %v935, 2147483648
      %v1357 = vor.u32 1.1754944e-38, %v1356
      %v1358 = vsel %vm1355, %v1357, %v1353
      %v1359 = vmul.f32 1.0, %v1358
      %v1360 = vrcp.pop %v936
      %v1361 = vmul.f32 %v936, %v1360
      %v1362 = vsub.f32 1.0, %v1361
      %v1363 = vmul.f32 %v1360, %v1362
      %v1364 = vadd.f32 %v1360, %v1363
      %vm1365 = vweird.f32 %v936
      %vm1366 = vweird.f32 %v1360
      %vm1367 = vmor %vm1365, %vm1366
      %v1368 = vsel %vm1367, %v1360, %v1364
      %v1369 = vand.u32 2147483647, %v936
      %vm1370 = vcmp.eq.f32.partialorder %v1369, 8.507059e+37
      %v1371 = vand.u32 %v936, 2147483648
      %v1372 = vor.u32 1.1754944e-38, %v1371
      %v1373 = vsel %vm1370, %v1372, %v1368
      %v1374 = vmul.f32 1.0, %v1373
      %v1375 = vrcp.pop %v937
      %v1376 = vmul.f32 %v937, %v1375
      %v1377 = vsub.f32 1.0, %v1376
      %v1378 = vmul.f32 %v1375, %v1377
      %v1379 = vadd.f32 %v1375, %v1378
      %vm1380 = vweird.f32 %v937
      %vm1381 = vweird.f32 %v1375
      %vm1382 = vmor %vm1380, %vm1381
      %v1383 = vsel %vm1382, %v1375, %v1379
      %v1384 = vand.u32 2147483647, %v937
      %vm1385 = vcmp.eq.f32.partialorder %v1384, 8.507059e+37
      %v1386 = vand.u32 %v937, 2147483648
      %v1387 = vor.u32 1.1754944e-38, %v1386
      %v1388 = vsel %vm1385, %v1387, %v1383
      %v1389 = vmul.f32 1.0, %v1388
      %v1390 = vrcp.pop %v938
      %v1391 = vmul.f32 %v938, %v1390
      %v1392 = vsub.f32 1.0, %v1391
      %v1393 = vmul.f32 %v1390, %v1392
      %v1394 = vadd.f32 %v1390, %v1393
      %vm1395 = vweird.f32 %v938
      %vm1396 = vweird.f32 %v1390
      %vm1397 = vmor %vm1395, %vm1396
      %v1398 = vsel %vm1397, %v1390, %v1394
      %v1399 = vand.u32 2147483647, %v938
      %vm1400 = vcmp.eq.f32.partialorder %v1399, 8.507059e+37
      %v1401 = vand.u32 %v938, 2147483648
      %v1402 = vor.u32 1.1754944e-38, %v1401
      %v1403 = vsel %vm1400, %v1402, %v1398
      %v1404 = vmul.f32 1.0, %v1403
      %v1405 = vrcp.pop %v939
      %v1406 = vmul.f32 %v939, %v1405
      %v1407 = vsub.f32 1.0, %v1406
      %v1408 = vmul.f32 %v1405, %v1407
      %v1409 = vadd.f32 %v1405, %v1408
      %vm1410 = vweird.f32 %v939
      %vm1411 = vweird.f32 %v1405
      %vm1412 = vmor %vm1410, %vm1411
      %v1413 = vsel %vm1412, %v1405, %v1409
      %v1414 = vand.u32 2147483647, %v939
      %vm1415 = vcmp.eq.f32.partialorder %v1414, 8.507059e+37
      %v1416 = vand.u32 %v939, 2147483648
      %v1417 = vor.u32 1.1754944e-38, %v1416
      %v1418 = vsel %vm1415, %v1417, %v1413
      %v1419 = vmul.f32 1.0, %v1418
      %v1420 = vmul.f32 %v278, %v954
      %v1421 = vmul.f32 %v279, %v969
      %v1422 = vmul.f32 %v280, %v984
      %v1423 = vmul.f32 %v281, %v999
      %v1424 = vmul.f32 %v282, %v1014
      %v1425 = vmul.f32 %v283, %v1029
      %v1426 = vmul.f32 %v284, %v1044
      %v1427 = vmul.f32 %v285, %v1059
      %v1428 = vmul.f32 %v286, %v1074
      %v1429 = vmul.f32 %v287, %v1089
      %v1430 = vmul.f32 %v288, %v1104
      %v1431 = vmul.f32 %v289, %v1119
      %v1432 = vmul.f32 %v290, %v1134
      %v1433 = vmul.f32 %v291, %v1149
      %v1434 = vmul.f32 %v292, %v1164
      %v1435 = vmul.f32 %v293, %v1179
      %v1436 = vmul.f32 %v294, %v1194
      %v1437 = vmul.f32 %v295, %v1209
      %v1438 = vmul.f32 %v296, %v1224
      %v1439 = vmul.f32 %v297, %v1239
      %v1440 = vmul.f32 %v298, %v1254
      %v1441 = vmul.f32 %v299, %v1269
      %v1442 = vmul.f32 %v300, %v1284
      %v1443 = vmul.f32 %v301, %v1299
      %v1444 = vmul.f32 %v302, %v1314
      %v1445 = vmul.f32 %v303, %v1329
      %v1446 = vmul.f32 %v304, %v1344
      %v1447 = vmul.f32 %v305, %v1359
      %v1448 = vmul.f32 %v306, %v1374
      %v1449 = vmul.f32 %v307, %v1389
      %v1450 = vmul.f32 %v308, %v1404
      %v1451 = vmul.f32 %v309, %v1419
      %1452 = vst.msk [vmem:[%s276] sm:$0xff] %vm322, %v1420
      %1453 = vst.msk [vmem:[%s276 + $0x8] sm:$0xff] %vm322, %v1421
      %1454 = vst.msk [vmem:[%s276 + $0x10] sm:$0xff] %vm322, %v1422
      %1455 = vst.msk [vmem:[%s276 + $0x18] sm:$0xff] %vm322, %v1423
      %1456 = vst.msk [vmem:[%s276 + $0x20] sm:$0xff] %vm322, %v1424
      %1457 = vst.msk [vmem:[%s276 + $0x28] sm:$0xff] %vm322, %v1425
      %1458 = vst.msk [vmem:[%s276 + $0x30] sm:$0xff] %vm322, %v1426
      %1459 = vst.msk [vmem:[%s276 + $0x38] sm:$0xff] %vm322, %v1427
      %1460 = vst.msk [vmem:[%s276 + $0x40] sm:$0xff] %vm322, %v1428
      %1461 = vst.msk [vmem:[%s276 + $0x48] sm:$0xff] %vm322, %v1429
      %1462 = vst.msk [vmem:[%s276 + $0x50] sm:$0xff] %vm322, %v1430
      %1463 = vst.msk [vmem:[%s276 + $0x58] sm:$0xff] %vm322, %v1431
      %1464 = vst.msk [vmem:[%s276 + $0x60] sm:$0xff] %vm322, %v1432
      %1465 = vst.msk [vmem:[%s276 + $0x68] sm:$0xff] %vm322, %v1433
      %1466 = vst.msk [vmem:[%s276 + $0x70] sm:$0xff] %vm322, %v1434
      %1467 = vst.msk [vmem:[%s276 + $0x78] sm:$0xff] %vm322, %v1435
      %1468 = vst.msk [vmem:[%s276 + $0x80] sm:$0xff] %vm322, %v1436
      %1469 = vst.msk [vmem:[%s276 + $0x88] sm:$0xff] %vm322, %v1437
      %1470 = vst.msk [vmem:[%s276 + $0x90] sm:$0xff] %vm322, %v1438
      %1471 = vst.msk [vmem:[%s276 + $0x98] sm:$0xff] %vm322, %v1439
      %1472 = vst.msk [vmem:[%s276 + $0xa0] sm:$0xff] %vm322, %v1440
      %1473 = vst.msk [vmem:[%s276 + $0xa8] sm:$0xff] %vm322, %v1441
      %1474 = vst.msk [vmem:[%s276 + $0xb0] sm:$0xff] %vm322, %v1442
      %1475 = vst.msk [vmem:[%s276 + $0xb8] sm:$0xff] %vm322, %v1443
      %1476 = vst.msk [vmem:[%s276 + $0xc0] sm:$0xff] %vm322, %v1444
      %1477 = vst.msk [vmem:[%s276 + $0xc8] sm:$0xff] %vm322, %v1445
      %1478 = vst.msk [vmem:[%s276 + $0xd0] sm:$0xff] %vm322, %v1446
      %1479 = vst.msk [vmem:[%s276 + $0xd8] sm:$0xff] %vm322, %v1447
      %1480 = vst.msk [vmem:[%s276 + $0xe0] sm:$0xff] %vm322, %v1448
      %1481 = vst.msk [vmem:[%s276 + $0xe8] sm:$0xff] %vm322, %v1449
      %1482 = vst.msk [vmem:[%s276 + $0xf0] sm:$0xff] %vm322, %v1450
      %1483 = vst.msk [vmem:[%s276 + $0xf8] sm:$0xff] %vm322, %v1451
      %s1484 = smul.u32 32, %s21
      %p1485 = scmp.lt.s32.totalorder %s20, 1
      %s1486 = scalar_select %p1485, %s20, 1
      %p1487 = scmp.lt.s32.totalorder %s1484, 31
      %s1488 = scalar_select %p1487, %s1484, 31
      %s1489 = smul.addr %s1486, 32
      %s1490 = sadd.s32 %s1488, %s1489
      %s1491 = smul.addr %s1490, 8
      %s1492 = scalar_lea.vmem %s5, %s1491
      // Predicated region
      $region41: #{tpu_custom_call.1} parent=39 // pred_check
        %p1493 = pneg %p165
      $region42: #{tpu_custom_call.1} parent=39 // pred_check_branch
        %1495 = sbr.rel (%p1493) target = $region44
      $region43: #{tpu_custom_call.1} parent=39 // pred_region
        %s1496 = smul.u32 32, %s21
      $region44: #{tpu_custom_call.1} parent=39 // pred_fallthru
        _
    $region40: #{tpu_custom_call.1} parent=5 // pred_fallthru
      _
    %p1497 = scmp.le.s32.totalorder 2, %s11
    // Predicated region
    $region45: #{tpu_custom_call.1} parent=5 // pred_check
      %p1498 = pneg %p1497
    $region46: #{tpu_custom_call.1} parent=5 // pred_check_branch
      %1500 = sbr.rel (%p1498) target = $region48
    $region47: #{tpu_custom_call.1} parent=5 // pred_region
      %s1501 = ssub.s32 %s11, 2
      // Predicated region
      $region49: #{tpu_custom_call.1} parent=47 // pred_check
        %p1502 = pneg %p171
      $region50: #{tpu_custom_call.1} parent=47 // pred_check_branch
        %1504 = sbr.rel (%p1502) target = $region52
      $region51: #{tpu_custom_call.1} parent=47 // pred_region
        %s1505 = smul.u32 32, %s23
        %p1506 = scmp.lt.s32.totalorder %s22, 1
        %s1507 = scalar_select %p1506, %s22, 1
        %p1508 = scmp.lt.s32.totalorder %s1505, 31
        %s1509 = scalar_select %p1508, %s1505, 31
        %s1510 = smul.addr %s1507, 32
        %s1511 = sadd.s32 %s1509, %s1510
        %s1512 = smul.addr %s1511, 8
        %s1513 = scalar_lea.vmem %s5, %s1512
      $region52: #{tpu_custom_call.1} parent=47 // pred_fallthru
        _
    $region48: #{tpu_custom_call.1} parent=5 // pred_fallthru
      _
  $region6: #{tpu_custom_call.1} parent=0 // loop_footer
    %s15 = sadd.s32 1, %s11
  $region7: #{tpu_custom_call.1} parent=0 // loop_footer_branch
    %10 = sbr.rel target = $region3
  $region8: #{tpu_custom_call.1} parent=0 // loop_exit
    _

</llo_original>
